<compile_context>
chip_gen: v7x
topology: tpu7x:2x2x1
jax: 0.10.0
libtpu: 0.0.40
codegen_flags: <defaults>
</compile_context>

<pallas_src>
import jax
import jax.numpy as jnp
from jax.experimental import pallas as pl
from jax.experimental.pallas import tpu as pltpu

HIDDEN = 256
LANE = 128


def _round_up(n, m):
    return ((n + m - 1) // m) * m


def mlp_kernel(x_ref, w0_ref, b0_ref, w1_ref, b1_ref, w2_ref, b2_ref,
               w4_ref, b4_ref, o_ref):
    # x arrives f32 straight from HBM; cast to bf16 in-register (VPU, free).
    x = x_ref[...].astype(jnp.bfloat16)
    # Layer 0: Linear + ReLU (bf16 operands, f32 MXU accumulation)
    h = jnp.dot(x, w0_ref[...], preferred_element_type=jnp.float32)
    h = jnp.maximum(h + b0_ref[...], 0.0).astype(jnp.bfloat16)
    # Layer 1: Linear + ReLU
    h = jnp.dot(h, w1_ref[...], preferred_element_type=jnp.float32)
    h = jnp.maximum(h + b1_ref[...], 0.0).astype(jnp.bfloat16)
    # Layer 2: Linear + ReLU
    h = jnp.dot(h, w2_ref[...], preferred_element_type=jnp.float32)
    h = jnp.maximum(h + b2_ref[...], 0.0).astype(jnp.bfloat16)
    # Layer 3 ('relu,' typo) is SKIPPED — matches the PyTorch forward() exactly.
    # Layer 4: Linear, identity activation (head columns padded to 128 lanes).
    y = jnp.dot(h, w4_ref[...], preferred_element_type=jnp.float32) + b4_ref[...]
    # Transpose on the XLU and store only the single valid output column as a
    # lane-dense row: writeback drops from (tb,128) f32 to (1,tb) f32.
    yt = jnp.transpose(y)                       # (pad_out, tb)
    o_ref[...] = yt[0:1, :].reshape(o_ref.shape)


def prepare_params(layer_params):
    """One-time prep: bf16 weight casts + lane-padding of the 1-wide head.

    Layer 3 in layer_params is ignored, mirroring the PyTorch forward()."""
    w0, b0 = layer_params[0]
    w1, b1 = layer_params[1]
    w2, b2 = layer_params[2]
    w4, b4 = layer_params[4]
    out_dim = w4.shape[1]
    assert out_dim == 1, "kernel stores only the first output column"
    w4p = jnp.zeros((w4.shape[0], LANE), jnp.bfloat16)
    w4p = w4p.at[:, :out_dim].set(w4.astype(jnp.bfloat16))
    b4p = jnp.zeros((1, LANE), jnp.float32)
    b4p = b4p.at[:, :out_dim].set(b4.astype(jnp.float32))
    return (w0.astype(jnp.bfloat16), b0.astype(jnp.float32),
            w1.astype(jnp.bfloat16), b1.astype(jnp.float32),
            w2.astype(jnp.bfloat16), b2.astype(jnp.float32),
            w4p, b4p)


def _choose_tb(B, tb):
    if tb is None:
        n_tc = 1
        try:
            # v7x has 2 TensorCores/chip: keep >=2 grid blocks so "parallel"
            # actually splits work; single-TC v5e/v6e get one big block.
            if "v7" in jax.devices()[0].device_kind.lower():
                n_tc = 2
        except Exception:
            pass
        tb = pl.cdiv(B, n_tc)
    tb = max(16, min(int(tb), 2048))
    # multiple of 128 (MXU M) when possible, else multiple of 16 (bf16 sublanes)
    return _round_up(tb, 128) if tb >= 128 else _round_up(tb, 16)


def mlp_forward(x, prepared, tb=None):
    """x: (B, input_dim) f32.  prepared: output of prepare_params()."""
    w0, b0, w1, b1, w2, b2, w4p, b4p = prepared
    B, in_dim = x.shape
    pad_out = w4p.shape[1]

    tb = _choose_tb(B, tb)
    num_blocks = pl.cdiv(B, tb)

    def weight_spec(shape):
        # constant index_map -> tile DMA'd once, stays VMEM-resident across grid
        return pl.BlockSpec(shape, lambda i: (0, 0))

    flops = 2 * num_blocks * tb * (in_dim * HIDDEN + 2 * HIDDEN * HIDDEN
                                   + HIDDEN * pad_out)
    bytes_accessed = (x.size * 4
                      + (w0.size + w1.size + w2.size + w4p.size) * 2
                      + (b0.size + b1.size + b2.size + b4p.size) * 4
                      + num_blocks * tb * 4)

    out = pl.pallas_call(
        mlp_kernel,
        out_shape=jax.ShapeDtypeStruct((num_blocks, 1, tb), jnp.float32),
        grid=(num_blocks,),
        in_specs=[
            pl.BlockSpec((tb, in_dim), lambda i: (i, 0)),   # x: batch-tiled, unpadded
            weight_spec((in_dim, HIDDEN)), weight_spec((1, HIDDEN)),
            weight_spec((HIDDEN, HIDDEN)), weight_spec((1, HIDDEN)),
            weight_spec((HIDDEN, HIDDEN)), weight_spec((1, HIDDEN)),
            weight_spec((HIDDEN, pad_out)), weight_spec((1, pad_out)),
        ],
        out_specs=pl.BlockSpec((1, 1, tb), lambda i: (i, 0, 0)),
        compiler_params=pltpu.CompilerParams(
            dimension_semantics=("parallel",)),  # 2x TCs on v7x; no-op v5e/v6e
        cost_estimate=pl.CostEstimate(flops=flops, transcendentals=0,
                                      bytes_accessed=bytes_accessed),
    )(x, w0, b0, w1, b1, w2, b2, w4p, b4p)

    # Blocks are contiguous in batch order; row-major flatten recovers it.
    # Ragged-tail garbage rows (if any) are sliced off here.
    return out.reshape(-1)[:B].reshape(B, 1)


def init_params(key, input_dim, neurons=(256, 256, 256, 256, 1)):
    """Deterministic init mirroring nn.Linear shapes (weights kept as (in,out))."""
    params = []
    n_in = input_dim
    keys = jax.random.split(key, 2 * len(neurons))
    for i, n_out in enumerate(neurons):
        bound = 1.0 / jnp.sqrt(jnp.float32(n_in))
        w = jax.random.uniform(keys[2 * i], (n_in, n_out), jnp.float32,
                               minval=-bound, maxval=bound)
        b = jax.random.uniform(keys[2 * i + 1], (1, n_out), jnp.float32,
                               minval=-bound, maxval=bound)
        params.append((w, b))
        n_in = n_out
    return params


def reference_forward(x, layer_params):
    """Pure-JAX reference mirroring the kernel math (bf16 in, f32 accumulate).

    Layer 3 skipped, exactly like the PyTorch forward()."""
    def dense(h, w, b):
        return jnp.dot(h.astype(jnp.bfloat16), w.astype(jnp.bfloat16),
                       preferred_element_type=jnp.float32) + b.astype(jnp.float32)

    h = jnp.maximum(dense(x, *layer_params[0]), 0.0)
    h = jnp.maximum(dense(h, *layer_params[1]), 0.0)
    h = jnp.maximum(dense(h, *layer_params[2]), 0.0)
    # layer 3 skipped ('relu,' typo)
    return dense(h, *layer_params[4])


if __name__ == "__main__":
    key = jax.random.PRNGKey(0)
    k_x, k_p = jax.random.split(key)

    batch = 500          # deliberately NOT tile-aligned -> exercises the ragged tail
    input_dim = 16       # housing feature vector
    x = jax.random.normal(k_x, (batch, input_dim), dtype=jnp.float32)

    layer_params = init_params(k_p, input_dim)
    prepared = prepare_params(layer_params)   # one-time bf16 casts + head padding

    fwd = jax.jit(mlp_forward)                # prepared weights passed in, never re-prepped
    out = jax.block_until_ready(fwd(x, prepared))

    ref = reference_forward(x, layer_params)
    assert out.shape == (batch, 1), out.shape
    assert jnp.allclose(out, ref, atol=1e-2, rtol=1e-2), \
        f"mismatch: max err {jnp.max(jnp.abs(out - ref))}"

    print("KERNEL_OK")
</pallas_src>

<mosaic_0001>
module attributes {stable_mosaic.version = 11 : i64} {
  func.func @mlp_kernel(%arg0: i32, %arg1: memref<512x16xf32, #tpu.memory_space<vmem>>, %arg2: memref<16x256xbf16, #tpu.memory_space<vmem>>, %arg3: memref<1x256xf32, #tpu.memory_space<vmem>>, %arg4: memref<256x256xbf16, #tpu.memory_space<vmem>>, %arg5: memref<1x256xf32, #tpu.memory_space<vmem>>, %arg6: memref<256x256xbf16, #tpu.memory_space<vmem>>, %arg7: memref<1x256xf32, #tpu.memory_space<vmem>>, %arg8: memref<256x128xbf16, #tpu.memory_space<vmem>>, %arg9: memref<1x128xf32, #tpu.memory_space<vmem>>, %arg10: memref<1x1x512xf32, #tpu.memory_space<vmem>>) attributes {dimension_semantics = [#tpu.dimension_semantics<parallel>], iteration_bounds = array<i64: 1>, scalar_prefetch = 0 : i64, scratch_operands = 0 : i64, tpu.core_type = #tpu.core_type<tc>, window_params = [{transform_indices = @transform_0, window_bounds = array<i64: 512, 16>}, {pipeline_mode = #tpu.pipeline_mode<synchronous>, transform_indices = @transform_1, window_bounds = array<i64: 16, 256>}, {pipeline_mode = #tpu.pipeline_mode<synchronous>, transform_indices = @transform_2, window_bounds = array<i64: 1, 256>}, {pipeline_mode = #tpu.pipeline_mode<synchronous>, transform_indices = @transform_3, window_bounds = array<i64: 256, 256>}, {pipeline_mode = #tpu.pipeline_mode<synchronous>, transform_indices = @transform_4, window_bounds = array<i64: 1, 256>}, {pipeline_mode = #tpu.pipeline_mode<synchronous>, transform_indices = @transform_5, window_bounds = array<i64: 256, 256>}, {pipeline_mode = #tpu.pipeline_mode<synchronous>, transform_indices = @transform_6, window_bounds = array<i64: 1, 256>}, {pipeline_mode = #tpu.pipeline_mode<synchronous>, transform_indices = @transform_7, window_bounds = array<i64: 256, 128>}, {pipeline_mode = #tpu.pipeline_mode<synchronous>, transform_indices = @transform_8, window_bounds = array<i64: 1, 128>}, {transform_indices = @transform_9, window_bounds = array<i64: 1, 1, 512>}]} {
    %c0 = arith.constant 0 : index
    %c0_0 = arith.constant 0 : index
    %0 = vector.load %arg1[%c0, %c0_0] : memref<512x16xf32, #tpu.memory_space<vmem>>, vector<512x16xf32>
    %1 = arith.truncf %0 : vector<512x16xf32> to vector<512x16xbf16>
    %c0_1 = arith.constant 0 : index
    %c0_2 = arith.constant 0 : index
    %2 = vector.load %arg2[%c0_1, %c0_2] : memref<16x256xbf16, #tpu.memory_space<vmem>>, vector<16x256xbf16>
    %cst = arith.constant dense<0.000000e+00> : vector<512x256xf32>
    %3 = tpu.matmul %1, %2, %cst {dimension_numbers = #tpu.dot_dimension_numbers<[1], [0], [0], [1], [0, 0, 1, 1], [], []>} : vector<512x16xbf16>, vector<16x256xbf16>, vector<512x256xf32> -> vector<512x256xf32>
    %c0_3 = arith.constant 0 : index
    %c0_4 = arith.constant 0 : index
    %4 = vector.load %arg3[%c0_3, %c0_4] : memref<1x256xf32, #tpu.memory_space<vmem>>, vector<1x256xf32>
    %5 = vector.broadcast %4 : vector<1x256xf32> to vector<512x256xf32>
    %6 = arith.addf %3, %5 : vector<512x256xf32>
    %cst_5 = arith.constant 0.000000e+00 : f32
    %7 = vector.broadcast %cst_5 : f32 to vector<512x256xf32>
    %8 = arith.maximumf %6, %7 : vector<512x256xf32>
    %9 = arith.truncf %8 : vector<512x256xf32> to vector<512x256xbf16>
    %c0_6 = arith.constant 0 : index
    %c0_7 = arith.constant 0 : index
    %10 = vector.load %arg4[%c0_6, %c0_7] : memref<256x256xbf16, #tpu.memory_space<vmem>>, vector<256x256xbf16>
    %cst_8 = arith.constant dense<0.000000e+00> : vector<512x256xf32>
    %11 = tpu.matmul %9, %10, %cst_8 {dimension_numbers = #tpu.dot_dimension_numbers<[1], [0], [0], [1], [0, 0, 1, 1], [], []>} : vector<512x256xbf16>, vector<256x256xbf16>, vector<512x256xf32> -> vector<512x256xf32>
    %c0_9 = arith.constant 0 : index
    %c0_10 = arith.constant 0 : index
    %12 = vector.load %arg5[%c0_9, %c0_10] : memref<1x256xf32, #tpu.memory_space<vmem>>, vector<1x256xf32>
    %13 = vector.broadcast %12 : vector<1x256xf32> to vector<512x256xf32>
    %14 = arith.addf %11, %13 : vector<512x256xf32>
    %cst_11 = arith.constant 0.000000e+00 : f32
    %15 = vector.broadcast %cst_11 : f32 to vector<512x256xf32>
    %16 = arith.maximumf %14, %15 : vector<512x256xf32>
    %17 = arith.truncf %16 : vector<512x256xf32> to vector<512x256xbf16>
    %c0_12 = arith.constant 0 : index
    %c0_13 = arith.constant 0 : index
    %18 = vector.load %arg6[%c0_12, %c0_13] : memref<256x256xbf16, #tpu.memory_space<vmem>>, vector<256x256xbf16>
    %cst_14 = arith.constant dense<0.000000e+00> : vector<512x256xf32>
    %19 = tpu.matmul %17, %18, %cst_14 {dimension_numbers = #tpu.dot_dimension_numbers<[1], [0], [0], [1], [0, 0, 1, 1], [], []>} : vector<512x256xbf16>, vector<256x256xbf16>, vector<512x256xf32> -> vector<512x256xf32>
    %c0_15 = arith.constant 0 : index
    %c0_16 = arith.constant 0 : index
    %20 = vector.load %arg7[%c0_15, %c0_16] : memref<1x256xf32, #tpu.memory_space<vmem>>, vector<1x256xf32>
    %21 = vector.broadcast %20 : vector<1x256xf32> to vector<512x256xf32>
    %22 = arith.addf %19, %21 : vector<512x256xf32>
    %cst_17 = arith.constant 0.000000e+00 : f32
    %23 = vector.broadcast %cst_17 : f32 to vector<512x256xf32>
    %24 = arith.maximumf %22, %23 : vector<512x256xf32>
    %25 = arith.truncf %24 : vector<512x256xf32> to vector<512x256xbf16>
    %c0_18 = arith.constant 0 : index
    %c0_19 = arith.constant 0 : index
    %26 = vector.load %arg8[%c0_18, %c0_19] : memref<256x128xbf16, #tpu.memory_space<vmem>>, vector<256x128xbf16>
    %cst_20 = arith.constant dense<0.000000e+00> : vector<512x128xf32>
    %27 = tpu.matmul %25, %26, %cst_20 {dimension_numbers = #tpu.dot_dimension_numbers<[1], [0], [0], [1], [0, 0, 1, 1], [], []>} : vector<512x256xbf16>, vector<256x128xbf16>, vector<512x128xf32> -> vector<512x128xf32>
    %c0_21 = arith.constant 0 : index
    %c0_22 = arith.constant 0 : index
    %28 = vector.load %arg9[%c0_21, %c0_22] : memref<1x128xf32, #tpu.memory_space<vmem>>, vector<1x128xf32>
    %29 = vector.broadcast %28 : vector<1x128xf32> to vector<512x128xf32>
    %30 = arith.addf %27, %29 : vector<512x128xf32>
    %31 = tpu.transpose %30, [1, 0] : vector<512x128xf32> -> vector<128x512xf32>
    %32 = vector.extract_strided_slice %31 {offsets = [0, 0], sizes = [1, 512], strides = [1, 1]} : vector<128x512xf32> to vector<1x512xf32>
    %33 = vector.shape_cast %32 : vector<1x512xf32> to vector<1x1x512xf32>
    %c0_23 = arith.constant 0 : index
    %c0_24 = arith.constant 0 : index
    %c0_25 = arith.constant 0 : index
    %34 = vector.load %arg10[%c0_23, %c0_24, %c0_25] : memref<1x1x512xf32, #tpu.memory_space<vmem>>, vector<1x1x512xf32>
    tpu.vector_store %arg10[%c0_23, %c0_24, %c0_25], %33 {strides = array<i32>} : memref<1x1x512xf32, #tpu.memory_space<vmem>>, vector<1x1x512xf32>,
    return
  }
  func.func @transform_0(%arg0: i32) -> (i32, i32) {
    %c0_i32 = arith.constant 0 : i32
    %c0_i32_0 = arith.constant 0 : i32
    return %arg0, %c0_i32 : i32, i32
  }
  func.func @transform_1(%arg0: i32) -> (i32, i32) {
    %c0_i32 = arith.constant 0 : i32
    %c0_i32_0 = arith.constant 0 : i32
    %c0_i32_1 = arith.constant 0 : i32
    return %c0_i32, %c0_i32_0 : i32, i32
  }
  func.func @transform_2(%arg0: i32) -> (i32, i32) {
    %c0_i32 = arith.constant 0 : i32
    %c0_i32_0 = arith.constant 0 : i32
    %c0_i32_1 = arith.constant 0 : i32
    return %c0_i32, %c0_i32_0 : i32, i32
  }
  func.func @transform_3(%arg0: i32) -> (i32, i32) {
    %c0_i32 = arith.constant 0 : i32
    %c0_i32_0 = arith.constant 0 : i32
    %c0_i32_1 = arith.constant 0 : i32
    return %c0_i32, %c0_i32_0 : i32, i32
  }
  func.func @transform_4(%arg0: i32) -> (i32, i32) {
    %c0_i32 = arith.constant 0 : i32
    %c0_i32_0 = arith.constant 0 : i32
    %c0_i32_1 = arith.constant 0 : i32
    return %c0_i32, %c0_i32_0 : i32, i32
  }
  func.func @transform_5(%arg0: i32) -> (i32, i32) {
    %c0_i32 = arith.constant 0 : i32
    %c0_i32_0 = arith.constant 0 : i32
    %c0_i32_1 = arith.constant 0 : i32
    return %c0_i32, %c0_i32_0 : i32, i32
  }
  func.func @transform_6(%arg0: i32) -> (i32, i32) {
    %c0_i32 = arith.constant 0 : i32
    %c0_i32_0 = arith.constant 0 : i32
    %c0_i32_1 = arith.constant 0 : i32
    return %c0_i32, %c0_i32_0 : i32, i32
  }
  func.func @transform_7(%arg0: i32) -> (i32, i32) {
    %c0_i32 = arith.constant 0 : i32
    %c0_i32_0 = arith.constant 0 : i32
    %c0_i32_1 = arith.constant 0 : i32
    return %c0_i32, %c0_i32_0 : i32, i32
  }
  func.func @transform_8(%arg0: i32) -> (i32, i32) {
    %c0_i32 = arith.constant 0 : i32
    %c0_i32_0 = arith.constant 0 : i32
    %c0_i32_1 = arith.constant 0 : i32
    return %c0_i32, %c0_i32_0 : i32, i32
  }
  func.func @transform_9(%arg0: i32) -> (i32, i32, i32) {
    %c0_i32 = arith.constant 0 : i32
    %c0_i32_0 = arith.constant 0 : i32
    %c0_i32_1 = arith.constant 0 : i32
    return %arg0, %c0_i32, %c0_i32_0 : i32, i32, i32
  }
}

</mosaic_0001>

<llo_original>
// kernel: mlp_forward.1
$region0: #{mlp_forward.1}
  #allocation0 [shape = 'u32[]', space=smem, size = 0x4, offset = 0x4, fixed_abs, tag = 'smem constant byte address 0x4 - core index']
  #allocation1 [shape = 'u32[144,128]{1,0:T(1,128)}', space=vmem, size = 0x12000, scoped, tag = 'internal scratch']
  %s0 = inlined_call_operand.vmem [shape: f32[500,16], index: 0, kind: input, shape index: {}]
  %s1 = inlined_call_operand.vmem [shape: bf16[16,256], index: 1, kind: input, shape index: {}]
  %s2 = inlined_call_operand.vmem [shape: f32[1,256], index: 2, kind: input, shape index: {}]
  %s3 = inlined_call_operand.vmem [shape: bf16[256,256], index: 3, kind: input, shape index: {}]
  %s4 = inlined_call_operand.vmem [shape: f32[1,256], index: 4, kind: input, shape index: {}]
  %s5 = inlined_call_operand.vmem [shape: bf16[256,256], index: 5, kind: input, shape index: {}]
  %s6 = inlined_call_operand.vmem [shape: f32[1,256], index: 6, kind: input, shape index: {}]
  %s7 = inlined_call_operand.hbm [shape: bf16[256,128], index: 7, kind: input, shape index: {}]
  %s8 = inlined_call_operand.vmem [shape: f32[1,128], index: 8, kind: input, shape index: {}]
  %s9 = inlined_call_operand.vmem [shape: f32[1,1,512], index: 9, kind: output, shape index: {}]
  %s10 = sld [smem:[#allocation0]]
  $region50: #{mlp_forward.1} parent=0
    _
  %s12 = ssub.s32 1, %s10
  %s13 = scalar_select 0, %s12, %s10
  $region1: #{mlp_forward.1} parent=0
    #allocation2 [shape = 'u8[65536]{0}', space=vmem, size = 0x10000, scoped, tag = 'input window, operand 7, single buffered']
    #allocation3 [shape = 's32[1]{0}', space=sflag, size = 0x4, scoped, tag = 'scoped memory for mlp_forward.1']
    %14 = vsyncpa [#allocation3], 0
    // Predicated region
    $region2: #{mlp_forward.1} parent=1 // pred_check
      _
    $region3: #{mlp_forward.1} parent=1 // pred_check_branch
      %16 = sbr.rel (0) target = $region5
    $region4: #{mlp_forward.1} parent=1 // pred_region
      _
    $region5: #{mlp_forward.1} parent=1 // pred_fallthru
      _
    // Predicated region
    $region6: #{mlp_forward.1} parent=1 // pred_check
      _
    $region7: #{mlp_forward.1} parent=1 // pred_check_branch
      %18 = sbr.rel (0) target = $region9
    $region8: #{mlp_forward.1} parent=1 // pred_region
      _
    $region9: #{mlp_forward.1} parent=1 // pred_fallthru
      _
    // Predicated region
    $region10: #{mlp_forward.1} parent=1 // pred_check
      _
    $region11: #{mlp_forward.1} parent=1 // pred_check_branch
      %20 = sbr.rel (0) target = $region13
    $region12: #{mlp_forward.1} parent=1 // pred_region
      _
    $region13: #{mlp_forward.1} parent=1 // pred_fallthru
      _
    // Predicated region
    $region14: #{mlp_forward.1} parent=1 // pred_check
      _
    $region15: #{mlp_forward.1} parent=1 // pred_check_branch
      %22 = sbr.rel (0) target = $region17
    $region16: #{mlp_forward.1} parent=1 // pred_region
      _
    $region17: #{mlp_forward.1} parent=1 // pred_fallthru
      _
    // Predicated region
    $region18: #{mlp_forward.1} parent=1 // pred_check
      _
    $region19: #{mlp_forward.1} parent=1 // pred_check_branch
      %24 = sbr.rel (0) target = $region21
    $region20: #{mlp_forward.1} parent=1 // pred_region
      _
    $region21: #{mlp_forward.1} parent=1 // pred_fallthru
      _
    // Predicated region
    $region22: #{mlp_forward.1} parent=1 // pred_check
      _
    $region23: #{mlp_forward.1} parent=1 // pred_check_branch
      %26 = sbr.rel (0) target = $region25
    $region24: #{mlp_forward.1} parent=1 // pred_region
      _
    $region25: #{mlp_forward.1} parent=1 // pred_fallthru
      _
    // Predicated region
    $region26: #{mlp_forward.1} parent=1 // pred_check
      _
    $region27: #{mlp_forward.1} parent=1 // pred_check_branch
      %28 = sbr.rel (0) target = $region29
    $region28: #{mlp_forward.1} parent=1 // pred_region
      _
    $region29: #{mlp_forward.1} parent=1 // pred_fallthru
      _
    // Predicated region
    $region30: #{mlp_forward.1} parent=1 // pred_check
      _
    $region31: #{mlp_forward.1} parent=1 // pred_check_branch
      %30 = sbr.rel (0) target = $region33
    $region32: #{mlp_forward.1} parent=1 // pred_region
      %s32 = ssub.s32 2048, 2048
      %33 = vsyncadd [#allocation3], %s32
      %s34 = sshll.u32 [#allocation2], 4
      %s35 = int_to_ptr.vmem [resolvable:$true] %s34
      %40 = dma.hbm_to_vmem [thread:$0]  %s7, 2048, %s35, [#allocation3], 64, 64, 4
    $region33: #{mlp_forward.1} parent=1 // pred_fallthru
      _
    // Predicated region
    $region34: #{mlp_forward.1} parent=1 // pred_check
      _
    $region35: #{mlp_forward.1} parent=1 // pred_check_branch
      %42 = sbr.rel (0) target = $region37
    $region36: #{mlp_forward.1} parent=1 // pred_region
      _
    $region37: #{mlp_forward.1} parent=1 // pred_fallthru
      _
    // Predicated region
    $region38: #{mlp_forward.1} parent=1 // pred_check
      _
    $region39: #{mlp_forward.1} parent=1 // pred_check_branch
      %44 = sbr.rel (0) target = $region41
    $region40: #{mlp_forward.1} parent=1 // pred_region
      %45 = dma.done [#allocation3], 2048
    $region41: #{mlp_forward.1} parent=1 // pred_fallthru
      _
    %v47 = vld [vmem:[%s0] sm:$0xff]
    %v48 = vld [vmem:[%s0 + $0x8] sm:$0xff]
    %v49 = vld [vmem:[%s0 + $0x10] sm:$0xff]
    %v50 = vld [vmem:[%s0 + $0x18] sm:$0xff]
    %v51 = vld [vmem:[%s0 + $0x20] sm:$0xff]
    %v52 = vld [vmem:[%s0 + $0x28] sm:$0xff]
    %v53 = vld [vmem:[%s0 + $0x30] sm:$0xff]
    %v54 = vld [vmem:[%s0 + $0x38] sm:$0xff]
    %v55 = vld [vmem:[%s0 + $0x40] sm:$0xff]
    %v56 = vld [vmem:[%s0 + $0x48] sm:$0xff]
    %v57 = vld [vmem:[%s0 + $0x50] sm:$0xff]
    %v58 = vld [vmem:[%s0 + $0x58] sm:$0xff]
    %v59 = vld [vmem:[%s0 + $0x60] sm:$0xff]
    %v60 = vld [vmem:[%s0 + $0x68] sm:$0xff]
    %v61 = vld [vmem:[%s0 + $0x70] sm:$0xff]
    %v62 = vld [vmem:[%s0 + $0x78] sm:$0xff]
    %v63 = vld [vmem:[%s0 + $0x80] sm:$0xff]
    %v64 = vld [vmem:[%s0 + $0x88] sm:$0xff]
    %v65 = vld [vmem:[%s0 + $0x90] sm:$0xff]
    %v66 = vld [vmem:[%s0 + $0x98] sm:$0xff]
    %v67 = vld [vmem:[%s0 + $0xa0] sm:$0xff]
    %v68 = vld [vmem:[%s0 + $0xa8] sm:$0xff]
    %v69 = vld [vmem:[%s0 + $0xb0] sm:$0xff]
    %v70 = vld [vmem:[%s0 + $0xb8] sm:$0xff]
    %v71 = vld [vmem:[%s0 + $0xc0] sm:$0xff]
    %v72 = vld [vmem:[%s0 + $0xc8] sm:$0xff]
    %v73 = vld [vmem:[%s0 + $0xd0] sm:$0xff]
    %v74 = vld [vmem:[%s0 + $0xd8] sm:$0xff]
    %v75 = vld [vmem:[%s0 + $0xe0] sm:$0xff]
    %v76 = vld [vmem:[%s0 + $0xe8] sm:$0xff]
    %v77 = vld [vmem:[%s0 + $0xf0] sm:$0xff]
    %v78 = vld [vmem:[%s0 + $0xf8] sm:$0xff]
    %v79 = vld [vmem:[%s0 + $0x100] sm:$0xff]
    %v80 = vld [vmem:[%s0 + $0x108] sm:$0xff]
    %v81 = vld [vmem:[%s0 + $0x110] sm:$0xff]
    %v82 = vld [vmem:[%s0 + $0x118] sm:$0xff]
    %v83 = vld [vmem:[%s0 + $0x120] sm:$0xff]
    %v84 = vld [vmem:[%s0 + $0x128] sm:$0xff]
    %v85 = vld [vmem:[%s0 + $0x130] sm:$0xff]
    %v86 = vld [vmem:[%s0 + $0x138] sm:$0xff]
    %v87 = vld [vmem:[%s0 + $0x140] sm:$0xff]
    %v88 = vld [vmem:[%s0 + $0x148] sm:$0xff]
    %v89 = vld [vmem:[%s0 + $0x150] sm:$0xff]
    %v90 = vld [vmem:[%s0 + $0x158] sm:$0xff]
    %v91 = vld [vmem:[%s0 + $0x160] sm:$0xff]
    %v92 = vld [vmem:[%s0 + $0x168] sm:$0xff]
    %v93 = vld [vmem:[%s0 + $0x170] sm:$0xff]
    %v94 = vld [vmem:[%s0 + $0x178] sm:$0xff]
    %v95 = vld [vmem:[%s0 + $0x180] sm:$0xff]
    %v96 = vld [vmem:[%s0 + $0x188] sm:$0xff]
    %v97 = vld [vmem:[%s0 + $0x190] sm:$0xff]
    %v98 = vld [vmem:[%s0 + $0x198] sm:$0xff]
    %v99 = vld [vmem:[%s0 + $0x1a0] sm:$0xff]
    %v100 = vld [vmem:[%s0 + $0x1a8] sm:$0xff]
    %v101 = vld [vmem:[%s0 + $0x1b0] sm:$0xff]
    %v102 = vld [vmem:[%s0 + $0x1b8] sm:$0xff]
    %v103 = vld [vmem:[%s0 + $0x1c0] sm:$0xff]
    %v104 = vld [vmem:[%s0 + $0x1c8] sm:$0xff]
    %v105 = vld [vmem:[%s0 + $0x1d0] sm:$0xff]
    %v106 = vld [vmem:[%s0 + $0x1d8] sm:$0xff]
    %v107 = vld [vmem:[%s0 + $0x1e0] sm:$0xff]
    %v108 = vld [vmem:[%s0 + $0x1e8] sm:$0xff]
    %v109 = vld [vmem:[%s0 + $0x1f0] sm:$0xff]
    %v110 = vld [vmem:[%s0 + $0x1f8] sm:$0xff]
    %v111 = vpack.c.bf16 %v48, %v47
    %v112 = vpack.c.bf16 %v50, %v49
    %v113 = vpack.c.bf16 %v52, %v51
    %v114 = vpack.c.bf16 %v54, %v53
    %v115 = vpack.c.bf16 %v56, %v55
    %v116 = vpack.c.bf16 %v58, %v57
    %v117 = vpack.c.bf16 %v60, %v59
    %v118 = vpack.c.bf16 %v62, %v61
    %v119 = vpack.c.bf16 %v64, %v63
    %v120 = vpack.c.bf16 %v66, %v65
    %v121 = vpack.c.bf16 %v68, %v67
    %v122 = vpack.c.bf16 %v70, %v69
    %v123 = vpack.c.bf16 %v72, %v71
    %v124 = vpack.c.bf16 %v74, %v73
    %v125 = vpack.c.bf16 %v76, %v75
    %v126 = vpack.c.bf16 %v78, %v77
    %v127 = vpack.c.bf16 %v80, %v79
    %v128 = vpack.c.bf16 %v82, %v81
    %v129 = vpack.c.bf16 %v84, %v83
    %v130 = vpack.c.bf16 %v86, %v85
    %v131 = vpack.c.bf16 %v88, %v87
    %v132 = vpack.c.bf16 %v90, %v89
    %v133 = vpack.c.bf16 %v92, %v91
    %v134 = vpack.c.bf16 %v94, %v93
    %v135 = vpack.c.bf16 %v96, %v95
    %v136 = vpack.c.bf16 %v98, %v97
    %v137 = vpack.c.bf16 %v100, %v99
    %v138 = vpack.c.bf16 %v102, %v101
    %v139 = vpack.c.bf16 %v104, %v103
    %v140 = vpack.c.bf16 %v106, %v105
    %v141 = vpack.c.bf16 %v108, %v107
    %v142 = vpack.c.bf16 %v110, %v109
    %v143 = vld [vmem:[%s1] sm:$0xff]
    %v144 = vld [vmem:[%s1 + $0x8] sm:$0xff]
    %v145 = vld [vmem:[%s2] sm:$0x3]
    %v147 = vlaneseq
    %v148 = vshrl.u32 %v147, 7
    %v149 = vsub.s32 0, %v148
    %v150 = vrot.slane %v145, %v149
    %v151 = vlaneseq
    %v152 = vshrl.u32 %v151, 7
    %v153 = vsub.s32 1, %v152
    %v154 = vrot.slane %v145, %v153
    %v159 = vunpack.c.l.b16 %v143
    %v160 = vunpack.c.h.b16 %v143
    %v161 = vunpack.c.l.b16 %v144
    %v162 = vunpack.c.h.b16 %v144
    %v163 = vpack.c.b16 %v161, %v159
    %v164 = vpack.c.b16 %v162, %v160
    %vm167 = vcmask 130048
    %v169 = vsel %vm167, %v111, 0
    %v172 = vsel %vm167, %v112, 0
    %v175 = vsel %vm167, %v113, 0
    %v178 = vsel %vm167, %v114, 0
    %v181 = vsel %vm167, %v115, 0
    %v184 = vsel %vm167, %v116, 0
    %v187 = vsel %vm167, %v117, 0
    %v190 = vsel %vm167, %v118, 0
    %v193 = vsel %vm167, %v119, 0
    %v196 = vsel %vm167, %v120, 0
    %v199 = vsel %vm167, %v121, 0
    %v202 = vsel %vm167, %v122, 0
    %v205 = vsel %vm167, %v123, 0
    %v208 = vsel %vm167, %v124, 0
    %v211 = vsel %vm167, %v125, 0
    %v214 = vsel %vm167, %v126, 0
    %v217 = vsel %vm167, %v127, 0
    %v220 = vsel %vm167, %v128, 0
    %v223 = vsel %vm167, %v129, 0
    %v226 = vsel %vm167, %v130, 0
    %v229 = vsel %vm167, %v131, 0
    %v232 = vsel %vm167, %v132, 0
    %v235 = vsel %vm167, %v133, 0
    %v238 = vsel %vm167, %v134, 0
    %v241 = vsel %vm167, %v135, 0
    %v244 = vsel %vm167, %v136, 0
    %v247 = vsel %vm167, %v137, 0
    %v250 = vsel %vm167, %v138, 0
    %v253 = vsel %vm167, %v139, 0
    %v256 = vsel %vm167, %v140, 0
    %v259 = vsel %vm167, %v141, 0
    %v262 = vsel %vm167, %v142, 0
    %264 = vmatprep.subr.bf16.mxu0 %v164
    %265 = vmatpush1.bf16.msra.mxu0 %v163
    %266 = vmatprep.subr.bf16.mxu0 0
    %267 = vmatpush1.bf16.msra.mxu0 0
    %268 = vmatprep.subr.bf16.mxu0 0
    %269 = vmatpush1.bf16.msra.mxu0 0
    %270 = vmatprep.subr.bf16.mxu0 0
    %271 = vmatpush1.bf16.msra.mxu0 0
    %272 = vmatprep.subr.bf16.mxu0 0
    %273 = vmatpush1.bf16.msra.mxu0 0
    %274 = vmatprep.subr.bf16.mxu0 0
    %275 = vmatpush1.bf16.msra.mxu0 0
    %276 = vmatprep.subr.bf16.mxu0 0
    %277 = vmatpush1.bf16.msra.mxu0 0
    %278 = vmatprep.subr.bf16.mxu0 0
    %279 = vmatpush1.bf16.msra.mxu0 0
    %280 = vmatprep.subr.bf16.mxu0 0
    %281 = vmatpush1.bf16.msra.mxu0 0
    %282 = vmatprep.subr.bf16.mxu0 0
    %283 = vmatpush1.bf16.msra.mxu0 0
    %284 = vmatprep.subr.bf16.mxu0 0
    %285 = vmatpush1.bf16.msra.mxu0 0
    %286 = vmatprep.subr.bf16.mxu0 0
    %287 = vmatpush1.bf16.msra.mxu0 0
    %288 = vmatprep.subr.bf16.mxu0 0
    %289 = vmatpush1.bf16.msra.mxu0 0
    %290 = vmatprep.subr.bf16.mxu0 0
    %291 = vmatpush1.bf16.msra.mxu0 0
    %292 = vmatprep.subr.bf16.mxu0 0
    %293 = vmatpush1.bf16.msra.mxu0 0
    %294 = vmatprep.subr.bf16.mxu0 0
    %295 = vmatpush1.bf16.msra.mxu0 0
    %296 = vmatprep.mubr.bf16.mxu0 0
    %297 = vmatmul.mubr.bf16.gmra.mrb[0].mxu0 %v169
    %v298 = vpop.f32.mrb[0].mxu0
    %v299 = vadd.f32 %v150, %v298
    %v300 = vpop.f32.mrb[0].mxu0
    %v301 = vadd.f32 %v154, %v300
    %v302 = vpop.f32.mrb[0].mxu0
    %v303 = vadd.f32 %v150, %v302
    %v304 = vpop.f32.mrb[0].mxu0
    %v305 = vadd.f32 %v154, %v304
    %306 = vmatprep.mubr.bf16.mxu0 0
    %307 = vmatmul.mubr.bf16.gmra.mrb[0].mxu0 %v172
    %v308 = vpop.f32.mrb[0].mxu0
    %v309 = vadd.f32 %v150, %v308
    %v310 = vpop.f32.mrb[0].mxu0
    %v311 = vadd.f32 %v154, %v310
    %v312 = vpop.f32.mrb[0].mxu0
    %v313 = vadd.f32 %v150, %v312
    %v314 = vpop.f32.mrb[0].mxu0
    %v315 = vadd.f32 %v154, %v314
    %316 = vmatprep.mubr.bf16.mxu0 0
    %317 = vmatmul.mubr.bf16.gmra.mrb[0].mxu0 %v175
    %v318 = vpop.f32.mrb[0].mxu0
    %v319 = vadd.f32 %v150, %v318
    %v320 = vpop.f32.mrb[0].mxu0
    %v321 = vadd.f32 %v154, %v320
    %v322 = vpop.f32.mrb[0].mxu0
    %v323 = vadd.f32 %v150, %v322
    %v324 = vpop.f32.mrb[0].mxu0
    %v325 = vadd.f32 %v154, %v324
    %326 = vmatprep.mubr.bf16.mxu0 0
    %327 = vmatmul.mubr.bf16.gmra.mrb[0].mxu0 %v178
    %v328 = vpop.f32.mrb[0].mxu0
    %v329 = vadd.f32 %v150, %v328
    %v330 = vpop.f32.mrb[0].mxu0
    %v331 = vadd.f32 %v154, %v330
    %v332 = vpop.f32.mrb[0].mxu0
    %v333 = vadd.f32 %v150, %v332
    %v334 = vpop.f32.mrb[0].mxu0
    %v335 = vadd.f32 %v154, %v334
    %336 = vmatprep.mubr.bf16.mxu0 0
    %337 = vmatmul.mubr.bf16.gmra.mrb[0].mxu0 %v181
    %v338 = vpop.f32.mrb[0].mxu0
    %v339 = vadd.f32 %v150, %v338
    %v340 = vpop.f32.mrb[0].mxu0
    %v341 = vadd.f32 %v154, %v340
    %v342 = vpop.f32.mrb[0].mxu0
    %v343 = vadd.f32 %v150, %v342
    %v344 = vpop.f32.mrb[0].mxu0
    %v345 = vadd.f32 %v154, %v344
    %346 = vmatprep.mubr.bf16.mxu0 0
    %347 = vmatmul.mubr.bf16.gmra.mrb[0].mxu0 %v184
    %v348 = vpop.f32.mrb[0].mxu0
    %v349 = vadd.f32 %v150, %v348
    %v350 = vpop.f32.mrb[0].mxu0
    %v351 = vadd.f32 %v154, %v350
    %v352 = vpop.f32.mrb[0].mxu0
    %v353 = vadd.f32 %v150, %v352
    %v354 = vpop.f32.mrb[0].mxu0
    %v355 = vadd.f32 %v154, %v354
    %356 = vmatprep.mubr.bf16.mxu0 0
    %357 = vmatmul.mubr.bf16.gmra.mrb[0].mxu0 %v187
    %v358 = vpop.f32.mrb[0].mxu0
    %v359 = vadd.f32 %v150, %v358
    %v360 = vpop.f32.mrb[0].mxu0
    %v361 = vadd.f32 %v154, %v360
    %v362 = vpop.f32.mrb[0].mxu0
    %v363 = vadd.f32 %v150, %v362
    %v364 = vpop.f32.mrb[0].mxu0
    %v365 = vadd.f32 %v154, %v364
    %366 = vmatprep.mubr.bf16.mxu0 0
    %367 = vmatmul.mubr.bf16.gmra.mrb[0].mxu0 %v190
    %v368 = vpop.f32.mrb[0].mxu0
    %v369 = vadd.f32 %v150, %v368
    %v370 = vpop.f32.mrb[0].mxu0
    %v371 = vadd.f32 %v154, %v370
    %v372 = vpop.f32.mrb[0].mxu0
    %v373 = vadd.f32 %v150, %v372
    %v374 = vpop.f32.mrb[0].mxu0
    %v375 = vadd.f32 %v154, %v374
    %376 = vmatprep.mubr.bf16.mxu0 0
    %377 = vmatmul.mubr.bf16.gmra.mrb[0].mxu0 %v193
    %v378 = vpop.f32.mrb[0].mxu0
    %v379 = vadd.f32 %v150, %v378
    %v380 = vpop.f32.mrb[0].mxu0
    %v381 = vadd.f32 %v154, %v380
    %v382 = vpop.f32.mrb[0].mxu0
    %v383 = vadd.f32 %v150, %v382
    %v384 = vpop.f32.mrb[0].mxu0
    %v385 = vadd.f32 %v154, %v384
    %386 = vmatprep.mubr.bf16.mxu0 0
    %387 = vmatmul.mubr.bf16.gmra.mrb[0].mxu0 %v196
    %v388 = vpop.f32.mrb[0].mxu0
    %v389 = vadd.f32 %v150, %v388
    %v390 = vpop.f32.mrb[0].mxu0
    %v391 = vadd.f32 %v154, %v390
    %v392 = vpop.f32.mrb[0].mxu0
    %v393 = vadd.f32 %v150, %v392
    %v394 = vpop.f32.mrb[0].mxu0
    %v395 = vadd.f32 %v154, %v394
    %396 = vmatprep.mubr.bf16.mxu0 0
    %397 = vmatmul.mubr.bf16.gmra.mrb[0].mxu0 %v199
    %v398 = vpop.f32.mrb[0].mxu0
    %v399 = vadd.f32 %v150, %v398
    %v400 = vpop.f32.mrb[0].mxu0
    %v401 = vadd.f32 %v154, %v400
    %v402 = vpop.f32.mrb[0].mxu0
    %v403 = vadd.f32 %v150, %v402
    %v404 = vpop.f32.mrb[0].mxu0
    %v405 = vadd.f32 %v154, %v404
    %406 = vmatprep.mubr.bf16.mxu0 0
    %407 = vmatmul.mubr.bf16.gmra.mrb[0].mxu0 %v202
    %v408 = vpop.f32.mrb[0].mxu0
    %v409 = vadd.f32 %v150, %v408
    %v410 = vpop.f32.mrb[0].mxu0
    %v411 = vadd.f32 %v154, %v410
    %v412 = vpop.f32.mrb[0].mxu0
    %v413 = vadd.f32 %v150, %v412
    %v414 = vpop.f32.mrb[0].mxu0
    %v415 = vadd.f32 %v154, %v414
    %416 = vmatprep.mubr.bf16.mxu0 0
    %417 = vmatmul.mubr.bf16.gmra.mrb[0].mxu0 %v205
    %v418 = vpop.f32.mrb[0].mxu0
    %v419 = vadd.f32 %v150, %v418
    %v420 = vpop.f32.mrb[0].mxu0
    %v421 = vadd.f32 %v154, %v420
    %v422 = vpop.f32.mrb[0].mxu0
    %v423 = vadd.f32 %v150, %v422
    %v424 = vpop.f32.mrb[0].mxu0
    %v425 = vadd.f32 %v154, %v424
    %426 = vmatprep.mubr.bf16.mxu0 0
    %427 = vmatmul.mubr.bf16.gmra.mrb[0].mxu0 %v208
    %v428 = vpop.f32.mrb[0].mxu0
    %v429 = vadd.f32 %v150, %v428
    %v430 = vpop.f32.mrb[0].mxu0
    %v431 = vadd.f32 %v154, %v430
    %v432 = vpop.f32.mrb[0].mxu0
    %v433 = vadd.f32 %v150, %v432
    %v434 = vpop.f32.mrb[0].mxu0
    %v435 = vadd.f32 %v154, %v434
    %436 = vmatprep.mubr.bf16.mxu0 0
    %437 = vmatmul.mubr.bf16.gmra.mrb[0].mxu0 %v211
    %v438 = vpop.f32.mrb[0].mxu0
    %v439 = vadd.f32 %v150, %v438
    %v440 = vpop.f32.mrb[0].mxu0
    %v441 = vadd.f32 %v154, %v440
    %v442 = vpop.f32.mrb[0].mxu0
    %v443 = vadd.f32 %v150, %v442
    %v444 = vpop.f32.mrb[0].mxu0
    %v445 = vadd.f32 %v154, %v444
    %446 = vmatprep.mubr.bf16.mxu0 0
    %447 = vmatmul.mubr.bf16.gmra.mrb[0].mxu0 %v214
    %v448 = vpop.f32.mrb[0].mxu0
    %v449 = vadd.f32 %v150, %v448
    %v450 = vpop.f32.mrb[0].mxu0
    %v451 = vadd.f32 %v154, %v450
    %v452 = vpop.f32.mrb[0].mxu0
    %v453 = vadd.f32 %v150, %v452
    %v454 = vpop.f32.mrb[0].mxu0
    %v455 = vadd.f32 %v154, %v454
    %456 = vmatprep.mubr.bf16.mxu0 0
    %457 = vmatmul.mubr.bf16.gmra.mrb[0].mxu0 %v217
    %v458 = vpop.f32.mrb[0].mxu0
    %v459 = vadd.f32 %v150, %v458
    %v460 = vpop.f32.mrb[0].mxu0
    %v461 = vadd.f32 %v154, %v460
    %v462 = vpop.f32.mrb[0].mxu0
    %v463 = vadd.f32 %v150, %v462
    %v464 = vpop.f32.mrb[0].mxu0
    %v465 = vadd.f32 %v154, %v464
    %466 = vmatprep.mubr.bf16.mxu0 0
    %467 = vmatmul.mubr.bf16.gmra.mrb[0].mxu0 %v220
    %v468 = vpop.f32.mrb[0].mxu0
    %v469 = vadd.f32 %v150, %v468
    %v470 = vpop.f32.mrb[0].mxu0
    %v471 = vadd.f32 %v154, %v470
    %v472 = vpop.f32.mrb[0].mxu0
    %v473 = vadd.f32 %v150, %v472
    %v474 = vpop.f32.mrb[0].mxu0
    %v475 = vadd.f32 %v154, %v474
    %476 = vmatprep.mubr.bf16.mxu0 0
    %477 = vmatmul.mubr.bf16.gmra.mrb[0].mxu0 %v223
    %v478 = vpop.f32.mrb[0].mxu0
    %v479 = vadd.f32 %v150, %v478
    %v480 = vpop.f32.mrb[0].mxu0
    %v481 = vadd.f32 %v154, %v480
    %v482 = vpop.f32.mrb[0].mxu0
    %v483 = vadd.f32 %v150, %v482
    %v484 = vpop.f32.mrb[0].mxu0
    %v485 = vadd.f32 %v154, %v484
    %486 = vmatprep.mubr.bf16.mxu0 0
    %487 = vmatmul.mubr.bf16.gmra.mrb[0].mxu0 %v226
    %v488 = vpop.f32.mrb[0].mxu0
    %v489 = vadd.f32 %v150, %v488
    %v490 = vpop.f32.mrb[0].mxu0
    %v491 = vadd.f32 %v154, %v490
    %v492 = vpop.f32.mrb[0].mxu0
    %v493 = vadd.f32 %v150, %v492
    %v494 = vpop.f32.mrb[0].mxu0
    %v495 = vadd.f32 %v154, %v494
    %496 = vmatprep.mubr.bf16.mxu0 0
    %497 = vmatmul.mubr.bf16.gmra.mrb[0].mxu0 %v229
    %v498 = vpop.f32.mrb[0].mxu0
    %v499 = vadd.f32 %v150, %v498
    %v500 = vpop.f32.mrb[0].mxu0
    %v501 = vadd.f32 %v154, %v500
    %v502 = vpop.f32.mrb[0].mxu0
    %v503 = vadd.f32 %v150, %v502
    %v504 = vpop.f32.mrb[0].mxu0
    %v505 = vadd.f32 %v154, %v504
    %506 = vmatprep.mubr.bf16.mxu0 0
    %507 = vmatmul.mubr.bf16.gmra.mrb[0].mxu0 %v232
    %v508 = vpop.f32.mrb[0].mxu0
    %v509 = vadd.f32 %v150, %v508
    %v510 = vpop.f32.mrb[0].mxu0
    %v511 = vadd.f32 %v154, %v510
    %v512 = vpop.f32.mrb[0].mxu0
    %v513 = vadd.f32 %v150, %v512
    %v514 = vpop.f32.mrb[0].mxu0
    %v515 = vadd.f32 %v154, %v514
    %516 = vmatprep.mubr.bf16.mxu0 0
    %517 = vmatmul.mubr.bf16.gmra.mrb[0].mxu0 %v235
    %v518 = vpop.f32.mrb[0].mxu0
    %v519 = vadd.f32 %v150, %v518
    %v520 = vpop.f32.mrb[0].mxu0
    %v521 = vadd.f32 %v154, %v520
    %v522 = vpop.f32.mrb[0].mxu0
    %v523 = vadd.f32 %v150, %v522
    %v524 = vpop.f32.mrb[0].mxu0
    %v525 = vadd.f32 %v154, %v524
    %526 = vmatprep.mubr.bf16.mxu0 0
    %527 = vmatmul.mubr.bf16.gmra.mrb[0].mxu0 %v238
    %v528 = vpop.f32.mrb[0].mxu0
    %v529 = vadd.f32 %v150, %v528
    %v530 = vpop.f32.mrb[0].mxu0
    %v531 = vadd.f32 %v154, %v530
    %v532 = vpop.f32.mrb[0].mxu0
    %v533 = vadd.f32 %v150, %v532
    %v534 = vpop.f32.mrb[0].mxu0
    %v535 = vadd.f32 %v154, %v534
    %536 = vmatprep.mubr.bf16.mxu0 0
    %537 = vmatmul.mubr.bf16.gmra.mrb[0].mxu0 %v241
    %v538 = vpop.f32.mrb[0].mxu0
    %v539 = vadd.f32 %v150, %v538
    %v540 = vpop.f32.mrb[0].mxu0
    %v541 = vadd.f32 %v154, %v540
    %v542 = vpop.f32.mrb[0].mxu0
    %v543 = vadd.f32 %v150, %v542
    %v544 = vpop.f32.mrb[0].mxu0
    %v545 = vadd.f32 %v154, %v544
    %546 = vmatprep.mubr.bf16.mxu0 0
    %547 = vmatmul.mubr.bf16.gmra.mrb[0].mxu0 %v244
    %v548 = vpop.f32.mrb[0].mxu0
    %v549 = vadd.f32 %v150, %v548
    %v550 = vpop.f32.mrb[0].mxu0
    %v551 = vadd.f32 %v154, %v550
    %v552 = vpop.f32.mrb[0].mxu0
    %v553 = vadd.f32 %v150, %v552
    %v554 = vpop.f32.mrb[0].mxu0
    %v555 = vadd.f32 %v154, %v554
    %556 = vmatprep.mubr.bf16.mxu0 0
    %557 = vmatmul.mubr.bf16.gmra.mrb[0].mxu0 %v247
    %v558 = vpop.f32.mrb[0].mxu0
    %v559 = vadd.f32 %v150, %v558
    %v560 = vpop.f32.mrb[0].mxu0
    %v561 = vadd.f32 %v154, %v560
    %v562 = vpop.f32.mrb[0].mxu0
    %v563 = vadd.f32 %v150, %v562
    %v564 = vpop.f32.mrb[0].mxu0
    %v565 = vadd.f32 %v154, %v564
    %566 = vmatprep.mubr.bf16.mxu0 0
    %567 = vmatmul.mubr.bf16.gmra.mrb[0].mxu0 %v250
    %v568 = vpop.f32.mrb[0].mxu0
    %v569 = vadd.f32 %v150, %v568
    %v570 = vpop.f32.mrb[0].mxu0
    %v571 = vadd.f32 %v154, %v570
    %v572 = vpop.f32.mrb[0].mxu0
    %v573 = vadd.f32 %v150, %v572
    %v574 = vpop.f32.mrb[0].mxu0
    %v575 = vadd.f32 %v154, %v574
    %576 = vmatprep.mubr.bf16.mxu0 0
    %577 = vmatmul.mubr.bf16.gmra.mrb[0].mxu0 %v253
    %v578 = vpop.f32.mrb[0].mxu0
    %v579 = vadd.f32 %v150, %v578
    %v580 = vpop.f32.mrb[0].mxu0
    %v581 = vadd.f32 %v154, %v580
    %v582 = vpop.f32.mrb[0].mxu0
    %v583 = vadd.f32 %v150, %v582
    %v584 = vpop.f32.mrb[0].mxu0
    %v585 = vadd.f32 %v154, %v584
    %586 = vmatprep.mubr.bf16.mxu0 0
    %587 = vmatmul.mubr.bf16.gmra.mrb[0].mxu0 %v256
    %v588 = vpop.f32.mrb[0].mxu0
    %v589 = vadd.f32 %v150, %v588
    %v590 = vpop.f32.mrb[0].mxu0
    %v591 = vadd.f32 %v154, %v590
    %v592 = vpop.f32.mrb[0].mxu0
    %v593 = vadd.f32 %v150, %v592
    %v594 = vpop.f32.mrb[0].mxu0
    %v595 = vadd.f32 %v154, %v594
    %596 = vmatprep.mubr.bf16.mxu0 0
    %597 = vmatmul.mubr.bf16.gmra.mrb[0].mxu0 %v259
    %v598 = vpop.f32.mrb[0].mxu0
    %v599 = vadd.f32 %v150, %v598
    %v600 = vpop.f32.mrb[0].mxu0
    %v601 = vadd.f32 %v154, %v600
    %v602 = vpop.f32.mrb[0].mxu0
    %v603 = vadd.f32 %v150, %v602
    %v604 = vpop.f32.mrb[0].mxu0
    %v605 = vadd.f32 %v154, %v604
    %606 = vmatprep.mubr.bf16.mxu0 0
    %607 = vmatmul.mubr.bf16.gmra.mrb[0].mxu0 %v262
    %v608 = vpop.f32.mrb[0].mxu0
    %v609 = vadd.f32 %v150, %v608
    %v610 = vpop.f32.mrb[0].mxu0
    %v611 = vadd.f32 %v154, %v610
    %v612 = vpop.f32.mrb[0].mxu0
    %v613 = vadd.f32 %v150, %v612
    %v614 = vpop.f32.mrb[0].mxu0
    %v615 = vadd.f32 %v154, %v614
    %616 = vdwg.mxu0
    %v617 = vmax.f32 %v299, 0.0
    %v618 = vmax.f32 %v301, 0.0
    %v619 = vmax.f32 %v303, 0.0
    %v620 = vmax.f32 %v305, 0.0
    %v621 = vmax.f32 %v309, 0.0
    %v622 = vmax.f32 %v311, 0.0
    %v623 = vmax.f32 %v313, 0.0
    %v624 = vmax.f32 %v315, 0.0
    %v625 = vmax.f32 %v319, 0.0
    %v626 = vmax.f32 %v321, 0.0
    %v627 = vmax.f32 %v323, 0.0
    %v628 = vmax.f32 %v325, 0.0
    %v629 = vmax.f32 %v329, 0.0
    %v630 = vmax.f32 %v331, 0.0
    %v631 = vmax.f32 %v333, 0.0
    %v632 = vmax.f32 %v335, 0.0
    %v633 = vmax.f32 %v339, 0.0
    %v634 = vmax.f32 %v341, 0.0
    %v635 = vmax.f32 %v343, 0.0
    %v636 = vmax.f32 %v345, 0.0
    %v637 = vmax.f32 %v349, 0.0
    %v638 = vmax.f32 %v351, 0.0
    %v639 = vmax.f32 %v353, 0.0
    %v640 = vmax.f32 %v355, 0.0
    %v641 = vmax.f32 %v359, 0.0
    %v642 = vmax.f32 %v361, 0.0
    %v643 = vmax.f32 %v363, 0.0
    %v644 = vmax.f32 %v365, 0.0
    %v645 = vmax.f32 %v369, 0.0
    %v646 = vmax.f32 %v371, 0.0
    %v647 = vmax.f32 %v373, 0.0
    %v648 = vmax.f32 %v375, 0.0
    %v649 = vmax.f32 %v379, 0.0
    %v650 = vmax.f32 %v381, 0.0
    %v651 = vmax.f32 %v383, 0.0
    %v652 = vmax.f32 %v385, 0.0
    %v653 = vmax.f32 %v389, 0.0
    %v654 = vmax.f32 %v391, 0.0
    %v655 = vmax.f32 %v393, 0.0
    %v656 = vmax.f32 %v395, 0.0
    %v657 = vmax.f32 %v399, 0.0
    %v658 = vmax.f32 %v401, 0.0
    %v659 = vmax.f32 %v403, 0.0
    %v660 = vmax.f32 %v405, 0.0
    %v661 = vmax.f32 %v409, 0.0
    %v662 = vmax.f32 %v411, 0.0
    %v663 = vmax.f32 %v413, 0.0
    %v664 = vmax.f32 %v415, 0.0
    %v665 = vmax.f32 %v419, 0.0
    %v666 = vmax.f32 %v421, 0.0
    %v667 = vmax.f32 %v423, 0.0
    %v668 = vmax.f32 %v425, 0.0
    %v669 = vmax.f32 %v429, 0.0
    %v670 = vmax.f32 %v431, 0.0
    %v671 = vmax.f32 %v433, 0.0
    %v672 = vmax.f32 %v435, 0.0
    %v673 = vmax.f32 %v439, 0.0
    %v674 = vmax.f32 %v441, 0.0
    %v675 = vmax.f32 %v443, 0.0
    %v676 = vmax.f32 %v445, 0.0
    %v677 = vmax.f32 %v449, 0.0
    %v678 = vmax.f32 %v451, 0.0
    %v679 = vmax.f32 %v453, 0.0
    %v680 = vmax.f32 %v455, 0.0
    %v681 = vmax.f32 %v459, 0.0
    %v682 = vmax.f32 %v461, 0.0
    %v683 = vmax.f32 %v463, 0.0
    %v684 = vmax.f32 %v465, 0.0
    %v685 = vmax.f32 %v469, 0.0
    %v686 = vmax.f32 %v471, 0.0
    %v687 = vmax.f32 %v473, 0.0
    %v688 = vmax.f32 %v475, 0.0
    %v689 = vmax.f32 %v479, 0.0
    %v690 = vmax.f32 %v481, 0.0
    %v691 = vmax.f32 %v483, 0.0
    %v692 = vmax.f32 %v485, 0.0
    %v693 = vmax.f32 %v489, 0.0
    %v694 = vmax.f32 %v491, 0.0
    %v695 = vmax.f32 %v493, 0.0
    %v696 = vmax.f32 %v495, 0.0
    %v697 = vmax.f32 %v499, 0.0
    %v698 = vmax.f32 %v501, 0.0
    %v699 = vmax.f32 %v503, 0.0
    %v700 = vmax.f32 %v505, 0.0
    %v701 = vmax.f32 %v509, 0.0
    %v702 = vmax.f32 %v511, 0.0
    %v703 = vmax.f32 %v513, 0.0
    %v704 = vmax.f32 %v515, 0.0
    %v705 = vmax.f32 %v519, 0.0
    %v706 = vmax.f32 %v521, 0.0
    %v707 = vmax.f32 %v523, 0.0
    %v708 = vmax.f32 %v525, 0.0
    %v709 = vmax.f32 %v529, 0.0
    %v710 = vmax.f32 %v531, 0.0
    %v711 = vmax.f32 %v533, 0.0
    %v712 = vmax.f32 %v535, 0.0
    %v713 = vmax.f32 %v539, 0.0
    %v714 = vmax.f32 %v541, 0.0
    %v715 = vmax.f32 %v543, 0.0
    %v716 = vmax.f32 %v545, 0.0
    %v717 = vmax.f32 %v549, 0.0
    %v718 = vmax.f32 %v551, 0.0
    %v719 = vmax.f32 %v553, 0.0
    %v720 = vmax.f32 %v555, 0.0
    %v721 = vmax.f32 %v559, 0.0
    %v722 = vmax.f32 %v561, 0.0
    %v723 = vmax.f32 %v563, 0.0
    %v724 = vmax.f32 %v565, 0.0
    %v725 = vmax.f32 %v569, 0.0
    %v726 = vmax.f32 %v571, 0.0
    %v727 = vmax.f32 %v573, 0.0
    %v728 = vmax.f32 %v575, 0.0
    %v729 = vmax.f32 %v579, 0.0
    %v730 = vmax.f32 %v581, 0.0
    %v731 = vmax.f32 %v583, 0.0
    %v732 = vmax.f32 %v585, 0.0
    %v733 = vmax.f32 %v589, 0.0
    %v734 = vmax.f32 %v591, 0.0
    %v735 = vmax.f32 %v593, 0.0
    %v736 = vmax.f32 %v595, 0.0
    %v737 = vmax.f32 %v599, 0.0
    %v738 = vmax.f32 %v601, 0.0
    %v739 = vmax.f32 %v603, 0.0
    %v740 = vmax.f32 %v605, 0.0
    %v741 = vmax.f32 %v609, 0.0
    %v742 = vmax.f32 %v611, 0.0
    %v743 = vmax.f32 %v613, 0.0
    %v744 = vmax.f32 %v615, 0.0
    %v745 = vpack.c.bf16 %v619, %v617
    %v746 = vpack.c.bf16 %v620, %v618
    %v747 = vpack.c.bf16 %v623, %v621
    %v748 = vpack.c.bf16 %v624, %v622
    %v749 = vpack.c.bf16 %v627, %v625
    %v750 = vpack.c.bf16 %v628, %v626
    %v751 = vpack.c.bf16 %v631, %v629
    %v752 = vpack.c.bf16 %v632, %v630
    %v753 = vpack.c.bf16 %v635, %v633
    %v754 = vpack.c.bf16 %v636, %v634
    %v755 = vpack.c.bf16 %v639, %v637
    %v756 = vpack.c.bf16 %v640, %v638
    %v757 = vpack.c.bf16 %v643, %v641
    %v758 = vpack.c.bf16 %v644, %v642
    %v759 = vpack.c.bf16 %v647, %v645
    %v760 = vpack.c.bf16 %v648, %v646
    %v761 = vpack.c.bf16 %v651, %v649
    %v762 = vpack.c.bf16 %v652, %v650
    %v763 = vpack.c.bf16 %v655, %v653
    %v764 = vpack.c.bf16 %v656, %v654
    %v765 = vpack.c.bf16 %v659, %v657
    %v766 = vpack.c.bf16 %v660, %v658
    %v767 = vpack.c.bf16 %v663, %v661
    %v768 = vpack.c.bf16 %v664, %v662
    %v769 = vpack.c.bf16 %v667, %v665
    %v770 = vpack.c.bf16 %v668, %v666
    %v771 = vpack.c.bf16 %v671, %v669
    %v772 = vpack.c.bf16 %v672, %v670
    %v773 = vpack.c.bf16 %v675, %v673
    %v774 = vpack.c.bf16 %v676, %v674
    %v775 = vpack.c.bf16 %v679, %v677
    %v776 = vpack.c.bf16 %v680, %v678
    %v777 = vpack.c.bf16 %v683, %v681
    %v778 = vpack.c.bf16 %v684, %v682
    %v779 = vpack.c.bf16 %v687, %v685
    %v780 = vpack.c.bf16 %v688, %v686
    %v781 = vpack.c.bf16 %v691, %v689
    %v782 = vpack.c.bf16 %v692, %v690
    %v783 = vpack.c.bf16 %v695, %v693
    %v784 = vpack.c.bf16 %v696, %v694
    %v785 = vpack.c.bf16 %v699, %v697
    %v786 = vpack.c.bf16 %v700, %v698
    %v787 = vpack.c.bf16 %v703, %v701
    %v788 = vpack.c.bf16 %v704, %v702
    %v789 = vpack.c.bf16 %v707, %v705
    %v790 = vpack.c.bf16 %v708, %v706
    %v791 = vpack.c.bf16 %v711, %v709
    %v792 = vpack.c.bf16 %v712, %v710
    %v793 = vpack.c.bf16 %v715, %v713
    %v794 = vpack.c.bf16 %v716, %v714
    %v795 = vpack.c.bf16 %v719, %v717
    %v796 = vpack.c.bf16 %v720, %v718
    %v797 = vpack.c.bf16 %v723, %v721
    %v798 = vpack.c.bf16 %v724, %v722
    %v799 = vpack.c.bf16 %v727, %v725
    %v800 = vpack.c.bf16 %v728, %v726
    %v801 = vpack.c.bf16 %v731, %v729
    %v802 = vpack.c.bf16 %v732, %v730
    %v803 = vpack.c.bf16 %v735, %v733
    %v804 = vpack.c.bf16 %v736, %v734
    %v805 = vpack.c.bf16 %v739, %v737
    %v806 = vpack.c.bf16 %v740, %v738
    %v807 = vpack.c.bf16 %v743, %v741
    %v808 = vpack.c.bf16 %v744, %v742
    %v809 = vld [vmem:[%s3] sm:$0xff]
    %v810 = vld [vmem:[%s3 + $0x8] sm:$0xff]
    %v811 = vld [vmem:[%s3 + $0x10] sm:$0xff]
    %v812 = vld [vmem:[%s3 + $0x18] sm:$0xff]
    %v813 = vld [vmem:[%s3 + $0x20] sm:$0xff]
    %v814 = vld [vmem:[%s3 + $0x28] sm:$0xff]
    %v815 = vld [vmem:[%s3 + $0x30] sm:$0xff]
    %v816 = vld [vmem:[%s3 + $0x38] sm:$0xff]
    %v817 = vld [vmem:[%s3 + $0x40] sm:$0xff]
    %v818 = vld [vmem:[%s3 + $0x48] sm:$0xff]
    %v819 = vld [vmem:[%s3 + $0x50] sm:$0xff]
    %v820 = vld [vmem:[%s3 + $0x58] sm:$0xff]
    %v821 = vld [vmem:[%s3 + $0x60] sm:$0xff]
    %v822 = vld [vmem:[%s3 + $0x68] sm:$0xff]
    %v823 = vld [vmem:[%s3 + $0x70] sm:$0xff]
    %v824 = vld [vmem:[%s3 + $0x78] sm:$0xff]
    %v825 = vld [vmem:[%s3 + $0x80] sm:$0xff]
    %v826 = vld [vmem:[%s3 + $0x88] sm:$0xff]
    %v827 = vld [vmem:[%s3 + $0x90] sm:$0xff]
    %v828 = vld [vmem:[%s3 + $0x98] sm:$0xff]
    %v829 = vld [vmem:[%s3 + $0xa0] sm:$0xff]
    %v830 = vld [vmem:[%s3 + $0xa8] sm:$0xff]
    %v831 = vld [vmem:[%s3 + $0xb0] sm:$0xff]
    %v832 = vld [vmem:[%s3 + $0xb8] sm:$0xff]
    %v833 = vld [vmem:[%s3 + $0xc0] sm:$0xff]
    %v834 = vld [vmem:[%s3 + $0xc8] sm:$0xff]
    %v835 = vld [vmem:[%s3 + $0xd0] sm:$0xff]
    %v836 = vld [vmem:[%s3 + $0xd8] sm:$0xff]
    %v837 = vld [vmem:[%s3 + $0xe0] sm:$0xff]
    %v838 = vld [vmem:[%s3 + $0xe8] sm:$0xff]
    %v839 = vld [vmem:[%s3 + $0xf0] sm:$0xff]
    %v840 = vld [vmem:[%s3 + $0xf8] sm:$0xff]
    %v841 = vld [vmem:[%s4] sm:$0x3]
    %v843 = vlaneseq
    %v844 = vshrl.u32 %v843, 7
    %v845 = vsub.s32 0, %v844
    %v846 = vrot.slane %v841, %v845
    %v847 = vlaneseq
    %v848 = vshrl.u32 %v847, 7
    %v849 = vsub.s32 1, %v848
    %v850 = vrot.slane %v841, %v849
    %v885 = vunpack.c.l.b16 %v809
    %v886 = vunpack.c.h.b16 %v809
    %v887 = vunpack.c.l.b16 %v810
    %v888 = vunpack.c.h.b16 %v810
    %v889 = vunpack.c.l.b16 %v811
    %v890 = vunpack.c.h.b16 %v811
    %v891 = vunpack.c.l.b16 %v812
    %v892 = vunpack.c.h.b16 %v812
    %v893 = vunpack.c.l.b16 %v813
    %v894 = vunpack.c.h.b16 %v813
    %v895 = vunpack.c.l.b16 %v814
    %v896 = vunpack.c.h.b16 %v814
    %v897 = vunpack.c.l.b16 %v815
    %v898 = vunpack.c.h.b16 %v815
    %v899 = vunpack.c.l.b16 %v816
    %v900 = vunpack.c.h.b16 %v816
    %v901 = vunpack.c.l.b16 %v817
    %v902 = vunpack.c.h.b16 %v817
    %v903 = vunpack.c.l.b16 %v818
    %v904 = vunpack.c.h.b16 %v818
    %v905 = vunpack.c.l.b16 %v819
    %v906 = vunpack.c.h.b16 %v819
    %v907 = vunpack.c.l.b16 %v820
    %v908 = vunpack.c.h.b16 %v820
    %v909 = vunpack.c.l.b16 %v821
    %v910 = vunpack.c.h.b16 %v821
    %v911 = vunpack.c.l.b16 %v822
    %v912 = vunpack.c.h.b16 %v822
    %v913 = vunpack.c.l.b16 %v823
    %v914 = vunpack.c.h.b16 %v823
    %v915 = vunpack.c.l.b16 %v824
    %v916 = vunpack.c.h.b16 %v824
    %v917 = vunpack.c.l.b16 %v825
    %v918 = vunpack.c.h.b16 %v825
    %v919 = vunpack.c.l.b16 %v826
    %v920 = vunpack.c.h.b16 %v826
    %v921 = vunpack.c.l.b16 %v827
    %v922 = vunpack.c.h.b16 %v827
    %v923 = vunpack.c.l.b16 %v828
    %v924 = vunpack.c.h.b16 %v828
    %v925 = vunpack.c.l.b16 %v829
    %v926 = vunpack.c.h.b16 %v829
    %v927 = vunpack.c.l.b16 %v830
    %v928 = vunpack.c.h.b16 %v830
    %v929 = vunpack.c.l.b16 %v831
    %v930 = vunpack.c.h.b16 %v831
    %v931 = vunpack.c.l.b16 %v832
    %v932 = vunpack.c.h.b16 %v832
    %v933 = vunpack.c.l.b16 %v833
    %v934 = vunpack.c.h.b16 %v833
    %v935 = vunpack.c.l.b16 %v834
    %v936 = vunpack.c.h.b16 %v834
    %v937 = vunpack.c.l.b16 %v835
    %v938 = vunpack.c.h.b16 %v835
    %v939 = vunpack.c.l.b16 %v836
    %v940 = vunpack.c.h.b16 %v836
    %v941 = vunpack.c.l.b16 %v837
    %v942 = vunpack.c.h.b16 %v837
    %v943 = vunpack.c.l.b16 %v838
    %v944 = vunpack.c.h.b16 %v838
    %v945 = vunpack.c.l.b16 %v839
    %v946 = vunpack.c.h.b16 %v839
    %v947 = vunpack.c.l.b16 %v840
    %v948 = vunpack.c.h.b16 %v840
    %v949 = vpack.c.b16 %v887, %v885
    %v950 = vpack.c.b16 %v888, %v886
    %v951 = vpack.c.b16 %v891, %v889
    %v952 = vpack.c.b16 %v892, %v890
    %v953 = vpack.c.b16 %v895, %v893
    %v954 = vpack.c.b16 %v896, %v894
    %v955 = vpack.c.b16 %v899, %v897
    %v956 = vpack.c.b16 %v900, %v898
    %v957 = vpack.c.b16 %v903, %v901
    %v958 = vpack.c.b16 %v904, %v902
    %v959 = vpack.c.b16 %v907, %v905
    %v960 = vpack.c.b16 %v908, %v906
    %v961 = vpack.c.b16 %v911, %v909
    %v962 = vpack.c.b16 %v912, %v910
    %v963 = vpack.c.b16 %v915, %v913
    %v964 = vpack.c.b16 %v916, %v914
    %v965 = vpack.c.b16 %v919, %v917
    %v966 = vpack.c.b16 %v920, %v918
    %v967 = vpack.c.b16 %v923, %v921
    %v968 = vpack.c.b16 %v924, %v922
    %v969 = vpack.c.b16 %v927, %v925
    %v970 = vpack.c.b16 %v928, %v926
    %v971 = vpack.c.b16 %v931, %v929
    %v972 = vpack.c.b16 %v932, %v930
    %v973 = vpack.c.b16 %v935, %v933
    %v974 = vpack.c.b16 %v936, %v934
    %v975 = vpack.c.b16 %v939, %v937
    %v976 = vpack.c.b16 %v940, %v938
    %v977 = vpack.c.b16 %v943, %v941
    %v978 = vpack.c.b16 %v944, %v942
    %v979 = vpack.c.b16 %v947, %v945
    %v980 = vpack.c.b16 %v948, %v946
    %1013 = vmatprep.subr.bf16.mxu0 %v950
    %1014 = vmatpush1.bf16.msra.mxu0 %v949
    %1015 = vmatprep.subr.bf16.mxu0 %v952
    %1016 = vmatpush1.bf16.msra.mxu0 %v951
    %1017 = vmatprep.subr.bf16.mxu0 %v954
    %1018 = vmatpush1.bf16.msra.mxu0 %v953
    %1019 = vmatprep.subr.bf16.mxu0 %v956
    %1020 = vmatpush1.bf16.msra.mxu0 %v955
    %1021 = vmatprep.subr.bf16.mxu0 %v958
    %1022 = vmatpush1.bf16.msra.mxu0 %v957
    %1023 = vmatprep.subr.bf16.mxu0 %v960
    %1024 = vmatpush1.bf16.msra.mxu0 %v959
    %1025 = vmatprep.subr.bf16.mxu0 %v962
    %1026 = vmatpush1.bf16.msra.mxu0 %v961
    %1027 = vmatprep.subr.bf16.mxu0 %v964
    %1028 = vmatpush1.bf16.msra.mxu0 %v963
    %1029 = vmatprep.subr.bf16.mxu0 %v966
    %1030 = vmatpush1.bf16.msra.mxu0 %v965
    %1031 = vmatprep.subr.bf16.mxu0 %v968
    %1032 = vmatpush1.bf16.msra.mxu0 %v967
    %1033 = vmatprep.subr.bf16.mxu0 %v970
    %1034 = vmatpush1.bf16.msra.mxu0 %v969
    %1035 = vmatprep.subr.bf16.mxu0 %v972
    %1036 = vmatpush1.bf16.msra.mxu0 %v971
    %1037 = vmatprep.subr.bf16.mxu0 %v974
    %1038 = vmatpush1.bf16.msra.mxu0 %v973
    %1039 = vmatprep.subr.bf16.mxu0 %v976
    %1040 = vmatpush1.bf16.msra.mxu0 %v975
    %1041 = vmatprep.subr.bf16.mxu0 %v978
    %1042 = vmatpush1.bf16.msra.mxu0 %v977
    %1043 = vmatprep.subr.bf16.mxu0 %v980
    %1044 = vmatpush1.bf16.msra.mxu0 %v979
    %1045 = vmatprep.mubr.bf16.mxu0 %v746
    %1046 = vmatmul.mubr.bf16.gmra.mrb[0].mxu0 %v745
    %v1047 = vpop.f32.mrb[0].mxu0
    %v1048 = vadd.f32 %v846, %v1047
    %v1049 = vpop.f32.mrb[0].mxu0
    %v1050 = vadd.f32 %v850, %v1049
    %v1051 = vpop.f32.mrb[0].mxu0
    %v1052 = vadd.f32 %v846, %v1051
    %v1053 = vpop.f32.mrb[0].mxu0
    %v1054 = vadd.f32 %v850, %v1053
    %1055 = vmatprep.mubr.bf16.mxu0 %v748
    %1056 = vmatmul.mubr.bf16.gmra.mrb[0].mxu0 %v747
    %v1057 = vpop.f32.mrb[0].mxu0
    %v1058 = vadd.f32 %v846, %v1057
    %v1059 = vpop.f32.mrb[0].mxu0
    %v1060 = vadd.f32 %v850, %v1059
    %v1061 = vpop.f32.mrb[0].mxu0
    %v1062 = vadd.f32 %v846, %v1061
    %v1063 = vpop.f32.mrb[0].mxu0
    %v1064 = vadd.f32 %v850, %v1063
    %1065 = vmatprep.mubr.bf16.mxu0 %v750
    %1066 = vmatmul.mubr.bf16.gmra.mrb[0].mxu0 %v749
    %v1067 = vpop.f32.mrb[0].mxu0
    %v1068 = vadd.f32 %v846, %v1067
    %v1069 = vpop.f32.mrb[0].mxu0
    %v1070 = vadd.f32 %v850, %v1069
    %v1071 = vpop.f32.mrb[0].mxu0
    %v1072 = vadd.f32 %v846, %v1071
    %v1073 = vpop.f32.mrb[0].mxu0
    %v1074 = vadd.f32 %v850, %v1073
    %1075 = vmatprep.mubr.bf16.mxu0 %v752
    %1076 = vmatmul.mubr.bf16.gmra.mrb[0].mxu0 %v751
    %v1077 = vpop.f32.mrb[0].mxu0
    %v1078 = vadd.f32 %v846, %v1077
    %v1079 = vpop.f32.mrb[0].mxu0
    %v1080 = vadd.f32 %v850, %v1079
    %v1081 = vpop.f32.mrb[0].mxu0
    %v1082 = vadd.f32 %v846, %v1081
    %v1083 = vpop.f32.mrb[0].mxu0
    %v1084 = vadd.f32 %v850, %v1083
    %1085 = vmatprep.mubr.bf16.mxu0 %v754
    %1086 = vmatmul.mubr.bf16.gmra.mrb[0].mxu0 %v753
    %v1087 = vpop.f32.mrb[0].mxu0
    %v1088 = vadd.f32 %v846, %v1087
    %v1089 = vpop.f32.mrb[0].mxu0
    %v1090 = vadd.f32 %v850, %v1089
    %v1091 = vpop.f32.mrb[0].mxu0
    %v1092 = vadd.f32 %v846, %v1091
    %v1093 = vpop.f32.mrb[0].mxu0
    %v1094 = vadd.f32 %v850, %v1093
    %1095 = vmatprep.mubr.bf16.mxu0 %v756
    %1096 = vmatmul.mubr.bf16.gmra.mrb[0].mxu0 %v755
    %v1097 = vpop.f32.mrb[0].mxu0
    %v1098 = vadd.f32 %v846, %v1097
    %v1099 = vpop.f32.mrb[0].mxu0
    %v1100 = vadd.f32 %v850, %v1099
    %v1101 = vpop.f32.mrb[0].mxu0
    %v1102 = vadd.f32 %v846, %v1101
    %v1103 = vpop.f32.mrb[0].mxu0
    %v1104 = vadd.f32 %v850, %v1103
    %1105 = vmatprep.mubr.bf16.mxu0 %v758
    %1106 = vmatmul.mubr.bf16.gmra.mrb[0].mxu0 %v757
    %v1107 = vpop.f32.mrb[0].mxu0
    %v1108 = vadd.f32 %v846, %v1107
    %v1109 = vpop.f32.mrb[0].mxu0
    %v1110 = vadd.f32 %v850, %v1109
    %v1111 = vpop.f32.mrb[0].mxu0
    %v1112 = vadd.f32 %v846, %v1111
    %v1113 = vpop.f32.mrb[0].mxu0
    %v1114 = vadd.f32 %v850, %v1113
    %1115 = vmatprep.mubr.bf16.mxu0 %v760
    %1116 = vmatmul.mubr.bf16.gmra.mrb[0].mxu0 %v759
    %v1117 = vpop.f32.mrb[0].mxu0
    %v1118 = vadd.f32 %v846, %v1117
    %v1119 = vpop.f32.mrb[0].mxu0
    %v1120 = vadd.f32 %v850, %v1119
    %v1121 = vpop.f32.mrb[0].mxu0
    %v1122 = vadd.f32 %v846, %v1121
    %v1123 = vpop.f32.mrb[0].mxu0
    %v1124 = vadd.f32 %v850, %v1123
    %1125 = vmatprep.mubr.bf16.mxu0 %v762
    %1126 = vmatmul.mubr.bf16.gmra.mrb[0].mxu0 %v761
    %v1127 = vpop.f32.mrb[0].mxu0
    %v1128 = vadd.f32 %v846, %v1127
    %v1129 = vpop.f32.mrb[0].mxu0
    %v1130 = vadd.f32 %v850, %v1129
    %v1131 = vpop.f32.mrb[0].mxu0
    %v1132 = vadd.f32 %v846, %v1131
    %v1133 = vpop.f32.mrb[0].mxu0
    %v1134 = vadd.f32 %v850, %v1133
    %1135 = vmatprep.mubr.bf16.mxu0 %v764
    %1136 = vmatmul.mubr.bf16.gmra.mrb[0].mxu0 %v763
    %v1137 = vpop.f32.mrb[0].mxu0
    %v1138 = vadd.f32 %v846, %v1137
    %v1139 = vpop.f32.mrb[0].mxu0
    %v1140 = vadd.f32 %v850, %v1139
    %v1141 = vpop.f32.mrb[0].mxu0
    %v1142 = vadd.f32 %v846, %v1141
    %v1143 = vpop.f32.mrb[0].mxu0
    %v1144 = vadd.f32 %v850, %v1143
    %1145 = vmatprep.mubr.bf16.mxu0 %v766
    %1146 = vmatmul.mubr.bf16.gmra.mrb[0].mxu0 %v765
    %v1147 = vpop.f32.mrb[0].mxu0
    %v1148 = vadd.f32 %v846, %v1147
    %v1149 = vpop.f32.mrb[0].mxu0
    %v1150 = vadd.f32 %v850, %v1149
    %v1151 = vpop.f32.mrb[0].mxu0
    %v1152 = vadd.f32 %v846, %v1151
    %v1153 = vpop.f32.mrb[0].mxu0
    %v1154 = vadd.f32 %v850, %v1153
    %1155 = vmatprep.mubr.bf16.mxu0 %v768
    %1156 = vmatmul.mubr.bf16.gmra.mrb[0].mxu0 %v767
    %v1157 = vpop.f32.mrb[0].mxu0
    %v1158 = vadd.f32 %v846, %v1157
    %v1159 = vpop.f32.mrb[0].mxu0
    %v1160 = vadd.f32 %v850, %v1159
    %v1161 = vpop.f32.mrb[0].mxu0
    %v1162 = vadd.f32 %v846, %v1161
    %v1163 = vpop.f32.mrb[0].mxu0
    %v1164 = vadd.f32 %v850, %v1163
    %1165 = vmatprep.mubr.bf16.mxu0 %v770
    %1166 = vmatmul.mubr.bf16.gmra.mrb[0].mxu0 %v769
    %v1167 = vpop.f32.mrb[0].mxu0
    %v1168 = vadd.f32 %v846, %v1167
    %v1169 = vpop.f32.mrb[0].mxu0
    %v1170 = vadd.f32 %v850, %v1169
    %v1171 = vpop.f32.mrb[0].mxu0
    %v1172 = vadd.f32 %v846, %v1171
    %v1173 = vpop.f32.mrb[0].mxu0
    %v1174 = vadd.f32 %v850, %v1173
    %1175 = vmatprep.mubr.bf16.mxu0 %v772
    %1176 = vmatmul.mubr.bf16.gmra.mrb[0].mxu0 %v771
    %v1177 = vpop.f32.mrb[0].mxu0
    %v1178 = vadd.f32 %v846, %v1177
    %v1179 = vpop.f32.mrb[0].mxu0
    %v1180 = vadd.f32 %v850, %v1179
    %v1181 = vpop.f32.mrb[0].mxu0
    %v1182 = vadd.f32 %v846, %v1181
    %v1183 = vpop.f32.mrb[0].mxu0
    %v1184 = vadd.f32 %v850, %v1183
    %1185 = vmatprep.mubr.bf16.mxu0 %v774
    %1186 = vmatmul.mubr.bf16.gmra.mrb[0].mxu0 %v773
    %v1187 = vpop.f32.mrb[0].mxu0
    %v1188 = vadd.f32 %v846, %v1187
    %v1189 = vpop.f32.mrb[0].mxu0
    %v1190 = vadd.f32 %v850, %v1189
    %v1191 = vpop.f32.mrb[0].mxu0
    %v1192 = vadd.f32 %v846, %v1191
    %v1193 = vpop.f32.mrb[0].mxu0
    %v1194 = vadd.f32 %v850, %v1193
    %1195 = vmatprep.mubr.bf16.mxu0 %v776
    %1196 = vmatmul.mubr.bf16.gmra.mrb[0].mxu0 %v775
    %v1197 = vpop.f32.mrb[0].mxu0
    %v1198 = vadd.f32 %v846, %v1197
    %v1199 = vpop.f32.mrb[0].mxu0
    %v1200 = vadd.f32 %v850, %v1199
    %v1201 = vpop.f32.mrb[0].mxu0
    %v1202 = vadd.f32 %v846, %v1201
    %v1203 = vpop.f32.mrb[0].mxu0
    %v1204 = vadd.f32 %v850, %v1203
    %1205 = vmatprep.mubr.bf16.mxu0 %v778
    %1206 = vmatmul.mubr.bf16.gmra.mrb[0].mxu0 %v777
    %v1207 = vpop.f32.mrb[0].mxu0
    %v1208 = vadd.f32 %v846, %v1207
    %v1209 = vpop.f32.mrb[0].mxu0
    %v1210 = vadd.f32 %v850, %v1209
    %v1211 = vpop.f32.mrb[0].mxu0
    %v1212 = vadd.f32 %v846, %v1211
    %v1213 = vpop.f32.mrb[0].mxu0
    %v1214 = vadd.f32 %v850, %v1213
    %1215 = vmatprep.mubr.bf16.mxu0 %v780
    %1216 = vmatmul.mubr.bf16.gmra.mrb[0].mxu0 %v779
    %v1217 = vpop.f32.mrb[0].mxu0
    %v1218 = vadd.f32 %v846, %v1217
    %v1219 = vpop.f32.mrb[0].mxu0
    %v1220 = vadd.f32 %v850, %v1219
    %v1221 = vpop.f32.mrb[0].mxu0
    %v1222 = vadd.f32 %v846, %v1221
    %v1223 = vpop.f32.mrb[0].mxu0
    %v1224 = vadd.f32 %v850, %v1223
    %1225 = vmatprep.mubr.bf16.mxu0 %v782
    %1226 = vmatmul.mubr.bf16.gmra.mrb[0].mxu0 %v781
    %v1227 = vpop.f32.mrb[0].mxu0
    %v1228 = vadd.f32 %v846, %v1227
    %v1229 = vpop.f32.mrb[0].mxu0
    %v1230 = vadd.f32 %v850, %v1229
    %v1231 = vpop.f32.mrb[0].mxu0
    %v1232 = vadd.f32 %v846, %v1231
    %v1233 = vpop.f32.mrb[0].mxu0
    %v1234 = vadd.f32 %v850, %v1233
    %1235 = vmatprep.mubr.bf16.mxu0 %v784
    %1236 = vmatmul.mubr.bf16.gmra.mrb[0].mxu0 %v783
    %v1237 = vpop.f32.mrb[0].mxu0
    %v1238 = vadd.f32 %v846, %v1237
    %v1239 = vpop.f32.mrb[0].mxu0
    %v1240 = vadd.f32 %v850, %v1239
    %v1241 = vpop.f32.mrb[0].mxu0
    %v1242 = vadd.f32 %v846, %v1241
    %v1243 = vpop.f32.mrb[0].mxu0
    %v1244 = vadd.f32 %v850, %v1243
    %1245 = vmatprep.mubr.bf16.mxu0 %v786
    %1246 = vmatmul.mubr.bf16.gmra.mrb[0].mxu0 %v785
    %v1247 = vpop.f32.mrb[0].mxu0
    %v1248 = vadd.f32 %v846, %v1247
    %v1249 = vpop.f32.mrb[0].mxu0
    %v1250 = vadd.f32 %v850, %v1249
    %v1251 = vpop.f32.mrb[0].mxu0
    %v1252 = vadd.f32 %v846, %v1251
    %v1253 = vpop.f32.mrb[0].mxu0
    %v1254 = vadd.f32 %v850, %v1253
    %1255 = vmatprep.mubr.bf16.mxu0 %v788
    %1256 = vmatmul.mubr.bf16.gmra.mrb[0].mxu0 %v787
    %v1257 = vpop.f32.mrb[0].mxu0
    %v1258 = vadd.f32 %v846, %v1257
    %v1259 = vpop.f32.mrb[0].mxu0
    %v1260 = vadd.f32 %v850, %v1259
    %v1261 = vpop.f32.mrb[0].mxu0
    %v1262 = vadd.f32 %v846, %v1261
    %v1263 = vpop.f32.mrb[0].mxu0
    %v1264 = vadd.f32 %v850, %v1263
    %1265 = vmatprep.mubr.bf16.mxu0 %v790
    %1266 = vmatmul.mubr.bf16.gmra.mrb[0].mxu0 %v789
    %v1267 = vpop.f32.mrb[0].mxu0
    %v1268 = vadd.f32 %v846, %v1267
    %v1269 = vpop.f32.mrb[0].mxu0
    %v1270 = vadd.f32 %v850, %v1269
    %v1271 = vpop.f32.mrb[0].mxu0
    %v1272 = vadd.f32 %v846, %v1271
    %v1273 = vpop.f32.mrb[0].mxu0
    %v1274 = vadd.f32 %v850, %v1273
    %1275 = vmatprep.mubr.bf16.mxu0 %v792
    %1276 = vmatmul.mubr.bf16.gmra.mrb[0].mxu0 %v791
    %v1277 = vpop.f32.mrb[0].mxu0
    %v1278 = vadd.f32 %v846, %v1277
    %v1279 = vpop.f32.mrb[0].mxu0
    %v1280 = vadd.f32 %v850, %v1279
    %v1281 = vpop.f32.mrb[0].mxu0
    %v1282 = vadd.f32 %v846, %v1281
    %v1283 = vpop.f32.mrb[0].mxu0
    %v1284 = vadd.f32 %v850, %v1283
    %1285 = vmatprep.mubr.bf16.mxu0 %v794
    %1286 = vmatmul.mubr.bf16.gmra.mrb[0].mxu0 %v793
    %v1287 = vpop.f32.mrb[0].mxu0
    %v1288 = vadd.f32 %v846, %v1287
    %v1289 = vpop.f32.mrb[0].mxu0
    %v1290 = vadd.f32 %v850, %v1289
    %v1291 = vpop.f32.mrb[0].mxu0
    %v1292 = vadd.f32 %v846, %v1291
    %v1293 = vpop.f32.mrb[0].mxu0
    %v1294 = vadd.f32 %v850, %v1293
    %1295 = vmatprep.mubr.bf16.mxu0 %v796
    %1296 = vmatmul.mubr.bf16.gmra.mrb[0].mxu0 %v795
    %v1297 = vpop.f32.mrb[0].mxu0
    %v1298 = vadd.f32 %v846, %v1297
    %v1299 = vpop.f32.mrb[0].mxu0
    %v1300 = vadd.f32 %v850, %v1299
    %v1301 = vpop.f32.mrb[0].mxu0
    %v1302 = vadd.f32 %v846, %v1301
    %v1303 = vpop.f32.mrb[0].mxu0
    %v1304 = vadd.f32 %v850, %v1303
    %1305 = vmatprep.mubr.bf16.mxu0 %v798
    %1306 = vmatmul.mubr.bf16.gmra.mrb[0].mxu0 %v797
    %v1307 = vpop.f32.mrb[0].mxu0
    %v1308 = vadd.f32 %v846, %v1307
    %v1309 = vpop.f32.mrb[0].mxu0
    %v1310 = vadd.f32 %v850, %v1309
    %v1311 = vpop.f32.mrb[0].mxu0
    %v1312 = vadd.f32 %v846, %v1311
    %v1313 = vpop.f32.mrb[0].mxu0
    %v1314 = vadd.f32 %v850, %v1313
    %1315 = vmatprep.mubr.bf16.mxu0 %v800
    %1316 = vmatmul.mubr.bf16.gmra.mrb[0].mxu0 %v799
    %v1317 = vpop.f32.mrb[0].mxu0
    %v1318 = vadd.f32 %v846, %v1317
    %v1319 = vpop.f32.mrb[0].mxu0
    %v1320 = vadd.f32 %v850, %v1319
    %v1321 = vpop.f32.mrb[0].mxu0
    %v1322 = vadd.f32 %v846, %v1321
    %v1323 = vpop.f32.mrb[0].mxu0
    %v1324 = vadd.f32 %v850, %v1323
    %1325 = vmatprep.mubr.bf16.mxu0 %v802
    %1326 = vmatmul.mubr.bf16.gmra.mrb[0].mxu0 %v801
    %v1327 = vpop.f32.mrb[0].mxu0
    %v1328 = vadd.f32 %v846, %v1327
    %v1329 = vpop.f32.mrb[0].mxu0
    %v1330 = vadd.f32 %v850, %v1329
    %v1331 = vpop.f32.mrb[0].mxu0
    %v1332 = vadd.f32 %v846, %v1331
    %v1333 = vpop.f32.mrb[0].mxu0
    %v1334 = vadd.f32 %v850, %v1333
    %1335 = vmatprep.mubr.bf16.mxu0 %v804
    %1336 = vmatmul.mubr.bf16.gmra.mrb[0].mxu0 %v803
    %v1337 = vpop.f32.mrb[0].mxu0
    %v1338 = vadd.f32 %v846, %v1337
    %v1339 = vpop.f32.mrb[0].mxu0
    %v1340 = vadd.f32 %v850, %v1339
    %v1341 = vpop.f32.mrb[0].mxu0
    %v1342 = vadd.f32 %v846, %v1341
    %v1343 = vpop.f32.mrb[0].mxu0
    %v1344 = vadd.f32 %v850, %v1343
    %1345 = vmatprep.mubr.bf16.mxu0 %v806
    %1346 = vmatmul.mubr.bf16.gmra.mrb[0].mxu0 %v805
    %v1347 = vpop.f32.mrb[0].mxu0
    %v1348 = vadd.f32 %v846, %v1347
    %v1349 = vpop.f32.mrb[0].mxu0
    %v1350 = vadd.f32 %v850, %v1349
    %v1351 = vpop.f32.mrb[0].mxu0
    %v1352 = vadd.f32 %v846, %v1351
    %v1353 = vpop.f32.mrb[0].mxu0
    %v1354 = vadd.f32 %v850, %v1353
    %1355 = vmatprep.mubr.bf16.mxu0 %v808
    %1356 = vmatmul.mubr.bf16.gmra.mrb[0].mxu0 %v807
    %v1357 = vpop.f32.mrb[0].mxu0
    %v1358 = vadd.f32 %v846, %v1357
    %v1359 = vpop.f32.mrb[0].mxu0
    %v1360 = vadd.f32 %v850, %v1359
    %v1361 = vpop.f32.mrb[0].mxu0
    %v1362 = vadd.f32 %v846, %v1361
    %v1363 = vpop.f32.mrb[0].mxu0
    %v1364 = vadd.f32 %v850, %v1363
    %1365 = vdwg.mxu0
    %v1366 = vmax.f32 %v1048, 0.0
    %v1367 = vmax.f32 %v1050, 0.0
    %v1368 = vmax.f32 %v1052, 0.0
    %v1369 = vmax.f32 %v1054, 0.0
    %v1370 = vmax.f32 %v1058, 0.0
    %v1371 = vmax.f32 %v1060, 0.0
    %v1372 = vmax.f32 %v1062, 0.0
    %v1373 = vmax.f32 %v1064, 0.0
    %v1374 = vmax.f32 %v1068, 0.0
    %v1375 = vmax.f32 %v1070, 0.0
    %v1376 = vmax.f32 %v1072, 0.0
    %v1377 = vmax.f32 %v1074, 0.0
    %v1378 = vmax.f32 %v1078, 0.0
    %v1379 = vmax.f32 %v1080, 0.0
    %v1380 = vmax.f32 %v1082, 0.0
    %v1381 = vmax.f32 %v1084, 0.0
    %v1382 = vmax.f32 %v1088, 0.0
    %v1383 = vmax.f32 %v1090, 0.0
    %v1384 = vmax.f32 %v1092, 0.0
    %v1385 = vmax.f32 %v1094, 0.0
    %v1386 = vmax.f32 %v1098, 0.0
    %v1387 = vmax.f32 %v1100, 0.0
    %v1388 = vmax.f32 %v1102, 0.0
    %v1389 = vmax.f32 %v1104, 0.0
    %v1390 = vmax.f32 %v1108, 0.0
    %v1391 = vmax.f32 %v1110, 0.0
    %v1392 = vmax.f32 %v1112, 0.0
    %v1393 = vmax.f32 %v1114, 0.0
    %v1394 = vmax.f32 %v1118, 0.0
    %v1395 = vmax.f32 %v1120, 0.0
    %v1396 = vmax.f32 %v1122, 0.0
    %v1397 = vmax.f32 %v1124, 0.0
    %v1398 = vmax.f32 %v1128, 0.0
    %v1399 = vmax.f32 %v1130, 0.0
    %v1400 = vmax.f32 %v1132, 0.0
    %v1401 = vmax.f32 %v1134, 0.0
    %v1402 = vmax.f32 %v1138, 0.0
    %v1403 = vmax.f32 %v1140, 0.0
    %v1404 = vmax.f32 %v1142, 0.0
    %v1405 = vmax.f32 %v1144, 0.0
    %v1406 = vmax.f32 %v1148, 0.0
    %v1407 = vmax.f32 %v1150, 0.0
    %v1408 = vmax.f32 %v1152, 0.0
    %v1409 = vmax.f32 %v1154, 0.0
    %v1410 = vmax.f32 %v1158, 0.0
    %v1411 = vmax.f32 %v1160, 0.0
    %v1412 = vmax.f32 %v1162, 0.0
    %v1413 = vmax.f32 %v1164, 0.0
    %v1414 = vmax.f32 %v1168, 0.0
    %v1415 = vmax.f32 %v1170, 0.0
    %v1416 = vmax.f32 %v1172, 0.0
    %v1417 = vmax.f32 %v1174, 0.0
    %v1418 = vmax.f32 %v1178, 0.0
    %v1419 = vmax.f32 %v1180, 0.0
    %v1420 = vmax.f32 %v1182, 0.0
    %v1421 = vmax.f32 %v1184, 0.0
    %v1422 = vmax.f32 %v1188, 0.0
    %v1423 = vmax.f32 %v1190, 0.0
    %v1424 = vmax.f32 %v1192, 0.0
    %v1425 = vmax.f32 %v1194, 0.0
    %v1426 = vmax.f32 %v1198, 0.0
    %v1427 = vmax.f32 %v1200, 0.0
    %v1428 = vmax.f32 %v1202, 0.0
    %v1429 = vmax.f32 %v1204, 0.0
    %v1430 = vmax.f32 %v1208, 0.0
    %v1431 = vmax.f32 %v1210, 0.0
    %v1432 = vmax.f32 %v1212, 0.0
    %v1433 = vmax.f32 %v1214, 0.0
    %v1434 = vmax.f32 %v1218, 0.0
    %v1435 = vmax.f32 %v1220, 0.0
    %v1436 = vmax.f32 %v1222, 0.0
    %v1437 = vmax.f32 %v1224, 0.0
    %v1438 = vmax.f32 %v1228, 0.0
    %v1439 = vmax.f32 %v1230, 0.0
    %v1440 = vmax.f32 %v1232, 0.0
    %v1441 = vmax.f32 %v1234, 0.0
    %v1442 = vmax.f32 %v1238, 0.0
    %v1443 = vmax.f32 %v1240, 0.0
    %v1444 = vmax.f32 %v1242, 0.0
    %v1445 = vmax.f32 %v1244, 0.0
    %v1446 = vmax.f32 %v1248, 0.0
    %v1447 = vmax.f32 %v1250, 0.0
    %v1448 = vmax.f32 %v1252, 0.0
    %v1449 = vmax.f32 %v1254, 0.0
    %v1450 = vmax.f32 %v1258, 0.0
    %v1451 = vmax.f32 %v1260, 0.0
    %v1452 = vmax.f32 %v1262, 0.0
    %v1453 = vmax.f32 %v1264, 0.0
    %v1454 = vmax.f32 %v1268, 0.0
    %v1455 = vmax.f32 %v1270, 0.0
    %v1456 = vmax.f32 %v1272, 0.0
    %v1457 = vmax.f32 %v1274, 0.0
    %v1458 = vmax.f32 %v1278, 0.0
    %v1459 = vmax.f32 %v1280, 0.0
    %v1460 = vmax.f32 %v1282, 0.0
    %v1461 = vmax.f32 %v1284, 0.0
    %v1462 = vmax.f32 %v1288, 0.0
    %v1463 = vmax.f32 %v1290, 0.0
    %v1464 = vmax.f32 %v1292, 0.0
    %v1465 = vmax.f32 %v1294, 0.0
    %v1466 = vmax.f32 %v1298, 0.0
    %v1467 = vmax.f32 %v1300, 0.0
    %v1468 = vmax.f32 %v1302, 0.0
    %v1469 = vmax.f32 %v1304, 0.0
    %v1470 = vmax.f32 %v1308, 0.0
    %v1471 = vmax.f32 %v1310, 0.0
    %v1472 = vmax.f32 %v1312, 0.0
    %v1473 = vmax.f32 %v1314, 0.0
    %v1474 = vmax.f32 %v1318, 0.0
    %v1475 = vmax.f32 %v1320, 0.0
    %v1476 = vmax.f32 %v1322, 0.0
    %v1477 = vmax.f32 %v1324, 0.0
    %v1478 = vmax.f32 %v1328, 0.0
    %v1479 = vmax.f32 %v1330, 0.0
    %v1480 = vmax.f32 %v1332, 0.0
    %v1481 = vmax.f32 %v1334, 0.0
    %v1482 = vmax.f32 %v1338, 0.0
    %v1483 = vmax.f32 %v1340, 0.0
    %v1484 = vmax.f32 %v1342, 0.0
    %v1485 = vmax.f32 %v1344, 0.0
    %v1486 = vmax.f32 %v1348, 0.0
    %v1487 = vmax.f32 %v1350, 0.0
    %v1488 = vmax.f32 %v1352, 0.0
    %v1489 = vmax.f32 %v1354, 0.0
    %v1490 = vmax.f32 %v1358, 0.0
    %v1491 = vmax.f32 %v1360, 0.0
    %v1492 = vmax.f32 %v1362, 0.0
    %v1493 = vmax.f32 %v1364, 0.0
    %v1494 = vpack.c.bf16 %v1368, %v1366
    %v1495 = vpack.c.bf16 %v1369, %v1367
    %v1496 = vpack.c.bf16 %v1372, %v1370
    %v1497 = vpack.c.bf16 %v1373, %v1371
    %v1498 = vpack.c.bf16 %v1376, %v1374
    %v1499 = vpack.c.bf16 %v1377, %v1375
    %v1500 = vpack.c.bf16 %v1380, %v1378
    %v1501 = vpack.c.bf16 %v1381, %v1379
    %v1502 = vpack.c.bf16 %v1384, %v1382
    %v1503 = vpack.c.bf16 %v1385, %v1383
    %v1504 = vpack.c.bf16 %v1388, %v1386
    %v1505 = vpack.c.bf16 %v1389, %v1387
    %v1506 = vpack.c.bf16 %v1392, %v1390
    %v1507 = vpack.c.bf16 %v1393, %v1391
    %v1508 = vpack.c.bf16 %v1396, %v1394
    %v1509 = vpack.c.bf16 %v1397, %v1395
    %v1510 = vpack.c.bf16 %v1400, %v1398
    %v1511 = vpack.c.bf16 %v1401, %v1399
    %v1512 = vpack.c.bf16 %v1404, %v1402
    %v1513 = vpack.c.bf16 %v1405, %v1403
    %v1514 = vpack.c.bf16 %v1408, %v1406
    %v1515 = vpack.c.bf16 %v1409, %v1407
    %v1516 = vpack.c.bf16 %v1412, %v1410
    %v1517 = vpack.c.bf16 %v1413, %v1411
    %v1518 = vpack.c.bf16 %v1416, %v1414
    %v1519 = vpack.c.bf16 %v1417, %v1415
    %v1520 = vpack.c.bf16 %v1420, %v1418
    %v1521 = vpack.c.bf16 %v1421, %v1419
    %v1522 = vpack.c.bf16 %v1424, %v1422
    %v1523 = vpack.c.bf16 %v1425, %v1423
    %v1524 = vpack.c.bf16 %v1428, %v1426
    %v1525 = vpack.c.bf16 %v1429, %v1427
    %v1526 = vpack.c.bf16 %v1432, %v1430
    %v1527 = vpack.c.bf16 %v1433, %v1431
    %v1528 = vpack.c.bf16 %v1436, %v1434
    %v1529 = vpack.c.bf16 %v1437, %v1435
    %v1530 = vpack.c.bf16 %v1440, %v1438
    %v1531 = vpack.c.bf16 %v1441, %v1439
    %v1532 = vpack.c.bf16 %v1444, %v1442
    %v1533 = vpack.c.bf16 %v1445, %v1443
    %v1534 = vpack.c.bf16 %v1448, %v1446
    %v1535 = vpack.c.bf16 %v1449, %v1447
    %v1536 = vpack.c.bf16 %v1452, %v1450
    %v1537 = vpack.c.bf16 %v1453, %v1451
    %v1538 = vpack.c.bf16 %v1456, %v1454
    %v1539 = vpack.c.bf16 %v1457, %v1455
    %v1540 = vpack.c.bf16 %v1460, %v1458
    %v1541 = vpack.c.bf16 %v1461, %v1459
    %v1542 = vpack.c.bf16 %v1464, %v1462
    %v1543 = vpack.c.bf16 %v1465, %v1463
    %v1544 = vpack.c.bf16 %v1468, %v1466
    %v1545 = vpack.c.bf16 %v1469, %v1467
    %v1546 = vpack.c.bf16 %v1472, %v1470
    %v1547 = vpack.c.bf16 %v1473, %v1471
    %v1548 = vpack.c.bf16 %v1476, %v1474
    %v1549 = vpack.c.bf16 %v1477, %v1475
    %v1550 = vpack.c.bf16 %v1480, %v1478
    %v1551 = vpack.c.bf16 %v1481, %v1479
    %v1552 = vpack.c.bf16 %v1484, %v1482
    %v1553 = vpack.c.bf16 %v1485, %v1483
    %v1554 = vpack.c.bf16 %v1488, %v1486
    %v1555 = vpack.c.bf16 %v1489, %v1487
    %v1556 = vpack.c.bf16 %v1492, %v1490
    %v1557 = vpack.c.bf16 %v1493, %v1491
    %v1558 = vld [vmem:[%s5] sm:$0xff]
    %v1559 = vld [vmem:[%s5 + $0x8] sm:$0xff]
    %v1560 = vld [vmem:[%s5 + $0x10] sm:$0xff]
    %v1561 = vld [vmem:[%s5 + $0x18] sm:$0xff]
    %v1562 = vld [vmem:[%s5 + $0x20] sm:$0xff]
    %v1563 = vld [vmem:[%s5 + $0x28] sm:$0xff]
    %v1564 = vld [vmem:[%s5 + $0x30] sm:$0xff]
    %v1565 = vld [vmem:[%s5 + $0x38] sm:$0xff]
    %v1566 = vld [vmem:[%s5 + $0x40] sm:$0xff]
    %v1567 = vld [vmem:[%s5 + $0x48] sm:$0xff]
    %v1568 = vld [vmem:[%s5 + $0x50] sm:$0xff]
    %v1569 = vld [vmem:[%s5 + $0x58] sm:$0xff]
    %v1570 = vld [vmem:[%s5 + $0x60] sm:$0xff]
    %v1571 = vld [vmem:[%s5 + $0x68] sm:$0xff]
    %v1572 = vld [vmem:[%s5 + $0x70] sm:$0xff]
    %v1573 = vld [vmem:[%s5 + $0x78] sm:$0xff]
    %v1574 = vld [vmem:[%s5 + $0x80] sm:$0xff]
    %v1575 = vld [vmem:[%s5 + $0x88] sm:$0xff]
    %v1576 = vld [vmem:[%s5 + $0x90] sm:$0xff]
    %v1577 = vld [vmem:[%s5 + $0x98] sm:$0xff]
    %v1578 = vld [vmem:[%s5 + $0xa0] sm:$0xff]
    %v1579 = vld [vmem:[%s5 + $0xa8] sm:$0xff]
    %v1580 = vld [vmem:[%s5 + $0xb0] sm:$0xff]
    %v1581 = vld [vmem:[%s5 + $0xb8] sm:$0xff]
    %v1582 = vld [vmem:[%s5 + $0xc0] sm:$0xff]
    %v1583 = vld [vmem:[%s5 + $0xc8] sm:$0xff]
    %v1584 = vld [vmem:[%s5 + $0xd0] sm:$0xff]
    %v1585 = vld [vmem:[%s5 + $0xd8] sm:$0xff]
    %v1586 = vld [vmem:[%s5 + $0xe0] sm:$0xff]
    %v1587 = vld [vmem:[%s5 + $0xe8] sm:$0xff]
    %v1588 = vld [vmem:[%s5 + $0xf0] sm:$0xff]
    %v1589 = vld [vmem:[%s5 + $0xf8] sm:$0xff]
    %v1590 = vld [vmem:[%s6] sm:$0x3]
    %v1592 = vlaneseq
    %v1593 = vshrl.u32 %v1592, 7
    %v1594 = vsub.s32 0, %v1593
    %v1595 = vrot.slane %v1590, %v1594
    %v1596 = vlaneseq
    %v1597 = vshrl.u32 %v1596, 7
    %v1598 = vsub.s32 1, %v1597
    %v1599 = vrot.slane %v1590, %v1598
    %v1634 = vunpack.c.l.b16 %v1558
    %v1635 = vunpack.c.h.b16 %v1558
    %v1636 = vunpack.c.l.b16 %v1559
    %v1637 = vunpack.c.h.b16 %v1559
    %v1638 = vunpack.c.l.b16 %v1560
    %v1639 = vunpack.c.h.b16 %v1560
    %v1640 = vunpack.c.l.b16 %v1561
    %v1641 = vunpack.c.h.b16 %v1561
    %v1642 = vunpack.c.l.b16 %v1562
    %v1643 = vunpack.c.h.b16 %v1562
    %v1644 = vunpack.c.l.b16 %v1563
    %v1645 = vunpack.c.h.b16 %v1563
    %v1646 = vunpack.c.l.b16 %v1564
    %v1647 = vunpack.c.h.b16 %v1564
    %v1648 = vunpack.c.l.b16 %v1565
    %v1649 = vunpack.c.h.b16 %v1565
    %v1650 = vunpack.c.l.b16 %v1566
    %v1651 = vunpack.c.h.b16 %v1566
    %v1652 = vunpack.c.l.b16 %v1567
    %v1653 = vunpack.c.h.b16 %v1567
    %v1654 = vunpack.c.l.b16 %v1568
    %v1655 = vunpack.c.h.b16 %v1568
    %v1656 = vunpack.c.l.b16 %v1569
    %v1657 = vunpack.c.h.b16 %v1569
    %v1658 = vunpack.c.l.b16 %v1570
    %v1659 = vunpack.c.h.b16 %v1570
    %v1660 = vunpack.c.l.b16 %v1571
    %v1661 = vunpack.c.h.b16 %v1571
    %v1662 = vunpack.c.l.b16 %v1572
    %v1663 = vunpack.c.h.b16 %v1572
    %v1664 = vunpack.c.l.b16 %v1573
    %v1665 = vunpack.c.h.b16 %v1573
    %v1666 = vunpack.c.l.b16 %v1574
    %v1667 = vunpack.c.h.b16 %v1574
    %v1668 = vunpack.c.l.b16 %v1575
    %v1669 = vunpack.c.h.b16 %v1575
    %v1670 = vunpack.c.l.b16 %v1576
    %v1671 = vunpack.c.h.b16 %v1576
    %v1672 = vunpack.c.l.b16 %v1577
    %v1673 = vunpack.c.h.b16 %v1577
    %v1674 = vunpack.c.l.b16 %v1578
    %v1675 = vunpack.c.h.b16 %v1578
    %v1676 = vunpack.c.l.b16 %v1579
    %v1677 = vunpack.c.h.b16 %v1579
    %v1678 = vunpack.c.l.b16 %v1580
    %v1679 = vunpack.c.h.b16 %v1580
    %v1680 = vunpack.c.l.b16 %v1581
    %v1681 = vunpack.c.h.b16 %v1581
    %v1682 = vunpack.c.l.b16 %v1582
    %v1683 = vunpack.c.h.b16 %v1582
    %v1684 = vunpack.c.l.b16 %v1583
    %v1685 = vunpack.c.h.b16 %v1583
    %v1686 = vunpack.c.l.b16 %v1584
    %v1687 = vunpack.c.h.b16 %v1584
    %v1688 = vunpack.c.l.b16 %v1585
    %v1689 = vunpack.c.h.b16 %v1585
    %v1690 = vunpack.c.l.b16 %v1586
    %v1691 = vunpack.c.h.b16 %v1586
    %v1692 = vunpack.c.l.b16 %v1587
    %v1693 = vunpack.c.h.b16 %v1587
    %v1694 = vunpack.c.l.b16 %v1588
    %v1695 = vunpack.c.h.b16 %v1588
    %v1696 = vunpack.c.l.b16 %v1589
    %v1697 = vunpack.c.h.b16 %v1589
    %v1698 = vpack.c.b16 %v1636, %v1634
    %v1699 = vpack.c.b16 %v1637, %v1635
    %v1700 = vpack.c.b16 %v1640, %v1638
    %v1701 = vpack.c.b16 %v1641, %v1639
    %v1702 = vpack.c.b16 %v1644, %v1642
    %v1703 = vpack.c.b16 %v1645, %v1643
    %v1704 = vpack.c.b16 %v1648, %v1646
    %v1705 = vpack.c.b16 %v1649, %v1647
    %v1706 = vpack.c.b16 %v1652, %v1650
    %v1707 = vpack.c.b16 %v1653, %v1651
    %v1708 = vpack.c.b16 %v1656, %v1654
    %v1709 = vpack.c.b16 %v1657, %v1655
    %v1710 = vpack.c.b16 %v1660, %v1658
    %v1711 = vpack.c.b16 %v1661, %v1659
    %v1712 = vpack.c.b16 %v1664, %v1662
    %v1713 = vpack.c.b16 %v1665, %v1663
    %v1714 = vpack.c.b16 %v1668, %v1666
    %v1715 = vpack.c.b16 %v1669, %v1667
    %v1716 = vpack.c.b16 %v1672, %v1670
    %v1717 = vpack.c.b16 %v1673, %v1671
    %v1718 = vpack.c.b16 %v1676, %v1674
    %v1719 = vpack.c.b16 %v1677, %v1675
    %v1720 = vpack.c.b16 %v1680, %v1678
    %v1721 = vpack.c.b16 %v1681, %v1679
    %v1722 = vpack.c.b16 %v1684, %v1682
    %v1723 = vpack.c.b16 %v1685, %v1683
    %v1724 = vpack.c.b16 %v1688, %v1686
    %v1725 = vpack.c.b16 %v1689, %v1687
    %v1726 = vpack.c.b16 %v1692, %v1690
    %v1727 = vpack.c.b16 %v1693, %v1691
    %v1728 = vpack.c.b16 %v1696, %v1694
    %v1729 = vpack.c.b16 %v1697, %v1695
    %1762 = vmatprep.subr.bf16.mxu0 %v1699
    %1763 = vmatpush1.bf16.msra.mxu0 %v1698
    %1764 = vmatprep.subr.bf16.mxu0 %v1701
    %1765 = vmatpush1.bf16.msra.mxu0 %v1700
    %1766 = vmatprep.subr.bf16.mxu0 %v1703
    %1767 = vmatpush1.bf16.msra.mxu0 %v1702
    %1768 = vmatprep.subr.bf16.mxu0 %v1705
    %1769 = vmatpush1.bf16.msra.mxu0 %v1704
    %1770 = vmatprep.subr.bf16.mxu0 %v1707
    %1771 = vmatpush1.bf16.msra.mxu0 %v1706
    %1772 = vmatprep.subr.bf16.mxu0 %v1709
    %1773 = vmatpush1.bf16.msra.mxu0 %v1708
    %1774 = vmatprep.subr.bf16.mxu0 %v1711
    %1775 = vmatpush1.bf16.msra.mxu0 %v1710
    %1776 = vmatprep.subr.bf16.mxu0 %v1713
    %1777 = vmatpush1.bf16.msra.mxu0 %v1712
    %1778 = vmatprep.subr.bf16.mxu0 %v1715
    %1779 = vmatpush1.bf16.msra.mxu0 %v1714
    %1780 = vmatprep.subr.bf16.mxu0 %v1717
    %1781 = vmatpush1.bf16.msra.mxu0 %v1716
    %1782 = vmatprep.subr.bf16.mxu0 %v1719
    %1783 = vmatpush1.bf16.msra.mxu0 %v1718
    %1784 = vmatprep.subr.bf16.mxu0 %v1721
    %1785 = vmatpush1.bf16.msra.mxu0 %v1720
    %1786 = vmatprep.subr.bf16.mxu0 %v1723
    %1787 = vmatpush1.bf16.msra.mxu0 %v1722
    %1788 = vmatprep.subr.bf16.mxu0 %v1725
    %1789 = vmatpush1.bf16.msra.mxu0 %v1724
    %1790 = vmatprep.subr.bf16.mxu0 %v1727
    %1791 = vmatpush1.bf16.msra.mxu0 %v1726
    %1792 = vmatprep.subr.bf16.mxu0 %v1729
    %1793 = vmatpush1.bf16.msra.mxu0 %v1728
    %1794 = vmatprep.mubr.bf16.mxu0 %v1495
    %1795 = vmatmul.mubr.bf16.gmra.mrb[0].mxu0 %v1494
    %v1796 = vpop.f32.mrb[0].mxu0
    %v1797 = vadd.f32 %v1595, %v1796
    %v1798 = vpop.f32.mrb[0].mxu0
    %v1799 = vadd.f32 %v1599, %v1798
    %v1800 = vpop.f32.mrb[0].mxu0
    %v1801 = vadd.f32 %v1595, %v1800
    %v1802 = vpop.f32.mrb[0].mxu0
    %v1803 = vadd.f32 %v1599, %v1802
    %1804 = vmatprep.mubr.bf16.mxu0 %v1497
    %1805 = vmatmul.mubr.bf16.gmra.mrb[0].mxu0 %v1496
    %v1806 = vpop.f32.mrb[0].mxu0
    %v1807 = vadd.f32 %v1595, %v1806
    %v1808 = vpop.f32.mrb[0].mxu0
    %v1809 = vadd.f32 %v1599, %v1808
    %v1810 = vpop.f32.mrb[0].mxu0
    %v1811 = vadd.f32 %v1595, %v1810
    %v1812 = vpop.f32.mrb[0].mxu0
    %v1813 = vadd.f32 %v1599, %v1812
    %1814 = vmatprep.mubr.bf16.mxu0 %v1499
    %1815 = vmatmul.mubr.bf16.gmra.mrb[0].mxu0 %v1498
    %v1816 = vpop.f32.mrb[0].mxu0
    %v1817 = vadd.f32 %v1595, %v1816
    %v1818 = vpop.f32.mrb[0].mxu0
    %v1819 = vadd.f32 %v1599, %v1818
    %v1820 = vpop.f32.mrb[0].mxu0
    %v1821 = vadd.f32 %v1595, %v1820
    %v1822 = vpop.f32.mrb[0].mxu0
    %v1823 = vadd.f32 %v1599, %v1822
    %1824 = vmatprep.mubr.bf16.mxu0 %v1501
    %1825 = vmatmul.mubr.bf16.gmra.mrb[0].mxu0 %v1500
    %v1826 = vpop.f32.mrb[0].mxu0
    %v1827 = vadd.f32 %v1595, %v1826
    %v1828 = vpop.f32.mrb[0].mxu0
    %v1829 = vadd.f32 %v1599, %v1828
    %v1830 = vpop.f32.mrb[0].mxu0
    %v1831 = vadd.f32 %v1595, %v1830
    %v1832 = vpop.f32.mrb[0].mxu0
    %v1833 = vadd.f32 %v1599, %v1832
    %1834 = vmatprep.mubr.bf16.mxu0 %v1503
    %1835 = vmatmul.mubr.bf16.gmra.mrb[0].mxu0 %v1502
    %v1836 = vpop.f32.mrb[0].mxu0
    %v1837 = vadd.f32 %v1595, %v1836
    %v1838 = vpop.f32.mrb[0].mxu0
    %v1839 = vadd.f32 %v1599, %v1838
    %v1840 = vpop.f32.mrb[0].mxu0
    %v1841 = vadd.f32 %v1595, %v1840
    %v1842 = vpop.f32.mrb[0].mxu0
    %v1843 = vadd.f32 %v1599, %v1842
    %1844 = vmatprep.mubr.bf16.mxu0 %v1505
    %1845 = vmatmul.mubr.bf16.gmra.mrb[0].mxu0 %v1504
    %v1846 = vpop.f32.mrb[0].mxu0
    %v1847 = vadd.f32 %v1595, %v1846
    %v1848 = vpop.f32.mrb[0].mxu0
    %v1849 = vadd.f32 %v1599, %v1848
    %v1850 = vpop.f32.mrb[0].mxu0
    %v1851 = vadd.f32 %v1595, %v1850
    %v1852 = vpop.f32.mrb[0].mxu0
    %v1853 = vadd.f32 %v1599, %v1852
    %1854 = vmatprep.mubr.bf16.mxu0 %v1507
    %1855 = vmatmul.mubr.bf16.gmra.mrb[0].mxu0 %v1506
    %v1856 = vpop.f32.mrb[0].mxu0
    %v1857 = vadd.f32 %v1595, %v1856
    %v1858 = vpop.f32.mrb[0].mxu0
    %v1859 = vadd.f32 %v1599, %v1858
    %v1860 = vpop.f32.mrb[0].mxu0
    %v1861 = vadd.f32 %v1595, %v1860
    %v1862 = vpop.f32.mrb[0].mxu0
    %v1863 = vadd.f32 %v1599, %v1862
    %1864 = vmatprep.mubr.bf16.mxu0 %v1509
    %1865 = vmatmul.mubr.bf16.gmra.mrb[0].mxu0 %v1508
    %v1866 = vpop.f32.mrb[0].mxu0
    %v1867 = vadd.f32 %v1595, %v1866
    %v1868 = vpop.f32.mrb[0].mxu0
    %v1869 = vadd.f32 %v1599, %v1868
    %v1870 = vpop.f32.mrb[0].mxu0
    %v1871 = vadd.f32 %v1595, %v1870
    %v1872 = vpop.f32.mrb[0].mxu0
    %v1873 = vadd.f32 %v1599, %v1872
    %1874 = vmatprep.mubr.bf16.mxu0 %v1511
    %1875 = vmatmul.mubr.bf16.gmra.mrb[0].mxu0 %v1510
    %v1876 = vpop.f32.mrb[0].mxu0
    %v1877 = vadd.f32 %v1595, %v1876
    %v1878 = vpop.f32.mrb[0].mxu0
    %v1879 = vadd.f32 %v1599, %v1878
    %v1880 = vpop.f32.mrb[0].mxu0
    %v1881 = vadd.f32 %v1595, %v1880
    %v1882 = vpop.f32.mrb[0].mxu0
    %v1883 = vadd.f32 %v1599, %v1882
    %1884 = vmatprep.mubr.bf16.mxu0 %v1513
    %1885 = vmatmul.mubr.bf16.gmra.mrb[0].mxu0 %v1512
    %v1886 = vpop.f32.mrb[0].mxu0
    %v1887 = vadd.f32 %v1595, %v1886
    %v1888 = vpop.f32.mrb[0].mxu0
    %v1889 = vadd.f32 %v1599, %v1888
    %v1890 = vpop.f32.mrb[0].mxu0
    %v1891 = vadd.f32 %v1595, %v1890
    %v1892 = vpop.f32.mrb[0].mxu0
    %v1893 = vadd.f32 %v1599, %v1892
    %1894 = vmatprep.mubr.bf16.mxu0 %v1515
    %1895 = vmatmul.mubr.bf16.gmra.mrb[0].mxu0 %v1514
    %v1896 = vpop.f32.mrb[0].mxu0
    %v1897 = vadd.f32 %v1595, %v1896
    %v1898 = vpop.f32.mrb[0].mxu0
    %v1899 = vadd.f32 %v1599, %v1898
    %v1900 = vpop.f32.mrb[0].mxu0
    %v1901 = vadd.f32 %v1595, %v1900
    %v1902 = vpop.f32.mrb[0].mxu0
    %v1903 = vadd.f32 %v1599, %v1902
    %1904 = vmatprep.mubr.bf16.mxu0 %v1517
    %1905 = vmatmul.mubr.bf16.gmra.mrb[0].mxu0 %v1516
    %v1906 = vpop.f32.mrb[0].mxu0
    %v1907 = vadd.f32 %v1595, %v1906
    %v1908 = vpop.f32.mrb[0].mxu0
    %v1909 = vadd.f32 %v1599, %v1908
    %v1910 = vpop.f32.mrb[0].mxu0
    %v1911 = vadd.f32 %v1595, %v1910
    %v1912 = vpop.f32.mrb[0].mxu0
    %v1913 = vadd.f32 %v1599, %v1912
    %1914 = vmatprep.mubr.bf16.mxu0 %v1519
    %1915 = vmatmul.mubr.bf16.gmra.mrb[0].mxu0 %v1518
    %v1916 = vpop.f32.mrb[0].mxu0
    %v1917 = vadd.f32 %v1595, %v1916
    %v1918 = vpop.f32.mrb[0].mxu0
    %v1919 = vadd.f32 %v1599, %v1918
    %v1920 = vpop.f32.mrb[0].mxu0
    %v1921 = vadd.f32 %v1595, %v1920
    %v1922 = vpop.f32.mrb[0].mxu0
    %v1923 = vadd.f32 %v1599, %v1922
    %1924 = vmatprep.mubr.bf16.mxu0 %v1521
    %1925 = vmatmul.mubr.bf16.gmra.mrb[0].mxu0 %v1520
    %v1926 = vpop.f32.mrb[0].mxu0
    %v1927 = vadd.f32 %v1595, %v1926
    %v1928 = vpop.f32.mrb[0].mxu0
    %v1929 = vadd.f32 %v1599, %v1928
    %v1930 = vpop.f32.mrb[0].mxu0
    %v1931 = vadd.f32 %v1595, %v1930
    %v1932 = vpop.f32.mrb[0].mxu0
    %v1933 = vadd.f32 %v1599, %v1932
    %1934 = vmatprep.mubr.bf16.mxu0 %v1523
    %1935 = vmatmul.mubr.bf16.gmra.mrb[0].mxu0 %v1522
    %v1936 = vpop.f32.mrb[0].mxu0
    %v1937 = vadd.f32 %v1595, %v1936
    %v1938 = vpop.f32.mrb[0].mxu0
    %v1939 = vadd.f32 %v1599, %v1938
    %v1940 = vpop.f32.mrb[0].mxu0
    %v1941 = vadd.f32 %v1595, %v1940
    %v1942 = vpop.f32.mrb[0].mxu0
    %v1943 = vadd.f32 %v1599, %v1942
    %1944 = vmatprep.mubr.bf16.mxu0 %v1525
    %1945 = vmatmul.mubr.bf16.gmra.mrb[0].mxu0 %v1524
    %v1946 = vpop.f32.mrb[0].mxu0
    %v1947 = vadd.f32 %v1595, %v1946
    %v1948 = vpop.f32.mrb[0].mxu0
    %v1949 = vadd.f32 %v1599, %v1948
    %v1950 = vpop.f32.mrb[0].mxu0
    %v1951 = vadd.f32 %v1595, %v1950
    %v1952 = vpop.f32.mrb[0].mxu0
    %v1953 = vadd.f32 %v1599, %v1952
    %1954 = vmatprep.mubr.bf16.mxu0 %v1527
    %1955 = vmatmul.mubr.bf16.gmra.mrb[0].mxu0 %v1526
    %v1956 = vpop.f32.mrb[0].mxu0
    %v1957 = vadd.f32 %v1595, %v1956
    %v1958 = vpop.f32.mrb[0].mxu0
    %v1959 = vadd.f32 %v1599, %v1958
    %v1960 = vpop.f32.mrb[0].mxu0
    %v1961 = vadd.f32 %v1595, %v1960
    %v1962 = vpop.f32.mrb[0].mxu0
    %v1963 = vadd.f32 %v1599, %v1962
    %1964 = vmatprep.mubr.bf16.mxu0 %v1529
    %1965 = vmatmul.mubr.bf16.gmra.mrb[0].mxu0 %v1528
    %v1966 = vpop.f32.mrb[0].mxu0
    %v1967 = vadd.f32 %v1595, %v1966
    %v1968 = vpop.f32.mrb[0].mxu0
    %v1969 = vadd.f32 %v1599, %v1968
    %v1970 = vpop.f32.mrb[0].mxu0
    %v1971 = vadd.f32 %v1595, %v1970
    %v1972 = vpop.f32.mrb[0].mxu0
    %v1973 = vadd.f32 %v1599, %v1972
    %1974 = vmatprep.mubr.bf16.mxu0 %v1531
    %1975 = vmatmul.mubr.bf16.gmra.mrb[0].mxu0 %v1530
    %v1976 = vpop.f32.mrb[0].mxu0
    %v1977 = vadd.f32 %v1595, %v1976
    %v1978 = vpop.f32.mrb[0].mxu0
    %v1979 = vadd.f32 %v1599, %v1978
    %v1980 = vpop.f32.mrb[0].mxu0
    %v1981 = vadd.f32 %v1595, %v1980
    %v1982 = vpop.f32.mrb[0].mxu0
    %v1983 = vadd.f32 %v1599, %v1982
    %1984 = vmatprep.mubr.bf16.mxu0 %v1533
    %1985 = vmatmul.mubr.bf16.gmra.mrb[0].mxu0 %v1532
    %v1986 = vpop.f32.mrb[0].mxu0
    %v1987 = vadd.f32 %v1595, %v1986
    %v1988 = vpop.f32.mrb[0].mxu0
    %v1989 = vadd.f32 %v1599, %v1988
    %v1990 = vpop.f32.mrb[0].mxu0
    %v1991 = vadd.f32 %v1595, %v1990
    %v1992 = vpop.f32.mrb[0].mxu0
    %v1993 = vadd.f32 %v1599, %v1992
    %1994 = vmatprep.mubr.bf16.mxu0 %v1535
    %1995 = vmatmul.mubr.bf16.gmra.mrb[0].mxu0 %v1534
    %v1996 = vpop.f32.mrb[0].mxu0
    %v1997 = vadd.f32 %v1595, %v1996
    %v1998 = vpop.f32.mrb[0].mxu0
    %v1999 = vadd.f32 %v1599, %v1998
    %v2000 = vpop.f32.mrb[0].mxu0
    %v2001 = vadd.f32 %v1595, %v2000
    %v2002 = vpop.f32.mrb[0].mxu0
    %v2003 = vadd.f32 %v1599, %v2002
    %2004 = vmatprep.mubr.bf16.mxu0 %v1537
    %2005 = vmatmul.mubr.bf16.gmra.mrb[0].mxu0 %v1536
    %v2006 = vpop.f32.mrb[0].mxu0
    %v2007 = vadd.f32 %v1595, %v2006
    %v2008 = vpop.f32.mrb[0].mxu0
    %v2009 = vadd.f32 %v1599, %v2008
    %v2010 = vpop.f32.mrb[0].mxu0
    %v2011 = vadd.f32 %v1595, %v2010
    %v2012 = vpop.f32.mrb[0].mxu0
    %v2013 = vadd.f32 %v1599, %v2012
    %2014 = vmatprep.mubr.bf16.mxu0 %v1539
    %2015 = vmatmul.mubr.bf16.gmra.mrb[0].mxu0 %v1538
    %v2016 = vpop.f32.mrb[0].mxu0
    %v2017 = vadd.f32 %v1595, %v2016
    %v2018 = vpop.f32.mrb[0].mxu0
    %v2019 = vadd.f32 %v1599, %v2018
    %v2020 = vpop.f32.mrb[0].mxu0
    %v2021 = vadd.f32 %v1595, %v2020
    %v2022 = vpop.f32.mrb[0].mxu0
    %v2023 = vadd.f32 %v1599, %v2022
    %2024 = vmatprep.mubr.bf16.mxu0 %v1541
    %2025 = vmatmul.mubr.bf16.gmra.mrb[0].mxu0 %v1540
    %v2026 = vpop.f32.mrb[0].mxu0
    %v2027 = vadd.f32 %v1595, %v2026
    %v2028 = vpop.f32.mrb[0].mxu0
    %v2029 = vadd.f32 %v1599, %v2028
    %v2030 = vpop.f32.mrb[0].mxu0
    %v2031 = vadd.f32 %v1595, %v2030
    %v2032 = vpop.f32.mrb[0].mxu0
    %v2033 = vadd.f32 %v1599, %v2032
    %2034 = vmatprep.mubr.bf16.mxu0 %v1543
    %2035 = vmatmul.mubr.bf16.gmra.mrb[0].mxu0 %v1542
    %v2036 = vpop.f32.mrb[0].mxu0
    %v2037 = vadd.f32 %v1595, %v2036
    %v2038 = vpop.f32.mrb[0].mxu0
    %v2039 = vadd.f32 %v1599, %v2038
    %v2040 = vpop.f32.mrb[0].mxu0
    %v2041 = vadd.f32 %v1595, %v2040
    %v2042 = vpop.f32.mrb[0].mxu0
    %v2043 = vadd.f32 %v1599, %v2042
    %2044 = vmatprep.mubr.bf16.mxu0 %v1545
    %2045 = vmatmul.mubr.bf16.gmra.mrb[0].mxu0 %v1544
    %v2046 = vpop.f32.mrb[0].mxu0
    %v2047 = vadd.f32 %v1595, %v2046
    %v2048 = vpop.f32.mrb[0].mxu0
    %v2049 = vadd.f32 %v1599, %v2048
    %v2050 = vpop.f32.mrb[0].mxu0
    %v2051 = vadd.f32 %v1595, %v2050
    %v2052 = vpop.f32.mrb[0].mxu0
    %v2053 = vadd.f32 %v1599, %v2052
    %2054 = vmatprep.mubr.bf16.mxu0 %v1547
    %2055 = vmatmul.mubr.bf16.gmra.mrb[0].mxu0 %v1546
    %v2056 = vpop.f32.mrb[0].mxu0
    %v2057 = vadd.f32 %v1595, %v2056
    %v2058 = vpop.f32.mrb[0].mxu0
    %v2059 = vadd.f32 %v1599, %v2058
    %v2060 = vpop.f32.mrb[0].mxu0
    %v2061 = vadd.f32 %v1595, %v2060
    %v2062 = vpop.f32.mrb[0].mxu0
    %v2063 = vadd.f32 %v1599, %v2062
    %2064 = vmatprep.mubr.bf16.mxu0 %v1549
    %2065 = vmatmul.mubr.bf16.gmra.mrb[0].mxu0 %v1548
    %v2066 = vpop.f32.mrb[0].mxu0
    %v2067 = vadd.f32 %v1595, %v2066
    %v2068 = vpop.f32.mrb[0].mxu0
    %v2069 = vadd.f32 %v1599, %v2068
    %v2070 = vpop.f32.mrb[0].mxu0
    %v2071 = vadd.f32 %v1595, %v2070
    %v2072 = vpop.f32.mrb[0].mxu0
    %v2073 = vadd.f32 %v1599, %v2072
    %2074 = vmatprep.mubr.bf16.mxu0 %v1551
    %2075 = vmatmul.mubr.bf16.gmra.mrb[0].mxu0 %v1550
    %v2076 = vpop.f32.mrb[0].mxu0
    %v2077 = vadd.f32 %v1595, %v2076
    %v2078 = vpop.f32.mrb[0].mxu0
    %v2079 = vadd.f32 %v1599, %v2078
    %v2080 = vpop.f32.mrb[0].mxu0
    %v2081 = vadd.f32 %v1595, %v2080
    %v2082 = vpop.f32.mrb[0].mxu0
    %v2083 = vadd.f32 %v1599, %v2082
    %2084 = vmatprep.mubr.bf16.mxu0 %v1553
    %2085 = vmatmul.mubr.bf16.gmra.mrb[0].mxu0 %v1552
    %v2086 = vpop.f32.mrb[0].mxu0
    %v2087 = vadd.f32 %v1595, %v2086
    %v2088 = vpop.f32.mrb[0].mxu0
    %v2089 = vadd.f32 %v1599, %v2088
    %v2090 = vpop.f32.mrb[0].mxu0
    %v2091 = vadd.f32 %v1595, %v2090
    %v2092 = vpop.f32.mrb[0].mxu0
    %v2093 = vadd.f32 %v1599, %v2092
    %2094 = vmatprep.mubr.bf16.mxu0 %v1555
    %2095 = vmatmul.mubr.bf16.gmra.mrb[0].mxu0 %v1554
    %v2096 = vpop.f32.mrb[0].mxu0
    %v2097 = vadd.f32 %v1595, %v2096
    %v2098 = vpop.f32.mrb[0].mxu0
    %v2099 = vadd.f32 %v1599, %v2098
    %v2100 = vpop.f32.mrb[0].mxu0
    %v2101 = vadd.f32 %v1595, %v2100
    %v2102 = vpop.f32.mrb[0].mxu0
    %v2103 = vadd.f32 %v1599, %v2102
    %2104 = vmatprep.mubr.bf16.mxu0 %v1557
    %2105 = vmatmul.mubr.bf16.gmra.mrb[0].mxu0 %v1556
    %v2106 = vpop.f32.mrb[0].mxu0
    %v2107 = vadd.f32 %v1595, %v2106
    %v2108 = vpop.f32.mrb[0].mxu0
    %v2109 = vadd.f32 %v1599, %v2108
    %v2110 = vpop.f32.mrb[0].mxu0
    %v2111 = vadd.f32 %v1595, %v2110
    %v2112 = vpop.f32.mrb[0].mxu0
    %v2113 = vadd.f32 %v1599, %v2112
    %2114 = vdwg.mxu0
    %v2115 = vmax.f32 %v1797, 0.0
    %v2116 = vmax.f32 %v1799, 0.0
    %v2117 = vmax.f32 %v1801, 0.0
    %v2118 = vmax.f32 %v1803, 0.0
    %v2119 = vmax.f32 %v1807, 0.0
    %v2120 = vmax.f32 %v1809, 0.0
    %v2121 = vmax.f32 %v1811, 0.0
    %v2122 = vmax.f32 %v1813, 0.0
    %v2123 = vmax.f32 %v1817, 0.0
    %v2124 = vmax.f32 %v1819, 0.0
    %v2125 = vmax.f32 %v1821, 0.0
    %v2126 = vmax.f32 %v1823, 0.0
    %v2127 = vmax.f32 %v1827, 0.0
    %v2128 = vmax.f32 %v1829, 0.0
    %v2129 = vmax.f32 %v1831, 0.0
    %v2130 = vmax.f32 %v1833, 0.0
    %v2131 = vmax.f32 %v1837, 0.0
    %v2132 = vmax.f32 %v1839, 0.0
    %v2133 = vmax.f32 %v1841, 0.0
    %v2134 = vmax.f32 %v1843, 0.0
    %v2135 = vmax.f32 %v1847, 0.0
    %v2136 = vmax.f32 %v1849, 0.0
    %v2137 = vmax.f32 %v1851, 0.0
    %v2138 = vmax.f32 %v1853, 0.0
    %v2139 = vmax.f32 %v1857, 0.0
    %v2140 = vmax.f32 %v1859, 0.0
    %v2141 = vmax.f32 %v1861, 0.0
    %v2142 = vmax.f32 %v1863, 0.0
    %v2143 = vmax.f32 %v1867, 0.0
    %v2144 = vmax.f32 %v1869, 0.0
    %v2145 = vmax.f32 %v1871, 0.0
    %v2146 = vmax.f32 %v1873, 0.0
    %v2147 = vmax.f32 %v1877, 0.0
    %v2148 = vmax.f32 %v1879, 0.0
    %v2149 = vmax.f32 %v1881, 0.0
    %v2150 = vmax.f32 %v1883, 0.0
    %v2151 = vmax.f32 %v1887, 0.0
    %v2152 = vmax.f32 %v1889, 0.0
    %v2153 = vmax.f32 %v1891, 0.0
    %v2154 = vmax.f32 %v1893, 0.0
    %v2155 = vmax.f32 %v1897, 0.0
    %v2156 = vmax.f32 %v1899, 0.0
    %v2157 = vmax.f32 %v1901, 0.0
    %v2158 = vmax.f32 %v1903, 0.0
    %v2159 = vmax.f32 %v1907, 0.0
    %v2160 = vmax.f32 %v1909, 0.0
    %v2161 = vmax.f32 %v1911, 0.0
    %v2162 = vmax.f32 %v1913, 0.0
    %v2163 = vmax.f32 %v1917, 0.0
    %v2164 = vmax.f32 %v1919, 0.0
    %v2165 = vmax.f32 %v1921, 0.0
    %v2166 = vmax.f32 %v1923, 0.0
    %v2167 = vmax.f32 %v1927, 0.0
    %v2168 = vmax.f32 %v1929, 0.0
    %v2169 = vmax.f32 %v1931, 0.0
    %v2170 = vmax.f32 %v1933, 0.0
    %v2171 = vmax.f32 %v1937, 0.0
    %v2172 = vmax.f32 %v1939, 0.0
    %v2173 = vmax.f32 %v1941, 0.0
    %v2174 = vmax.f32 %v1943, 0.0
    %v2175 = vmax.f32 %v1947, 0.0
    %v2176 = vmax.f32 %v1949, 0.0
    %v2177 = vmax.f32 %v1951, 0.0
    %v2178 = vmax.f32 %v1953, 0.0
    %v2179 = vmax.f32 %v1957, 0.0
    %v2180 = vmax.f32 %v1959, 0.0
    %v2181 = vmax.f32 %v1961, 0.0
    %v2182 = vmax.f32 %v1963, 0.0
    %v2183 = vmax.f32 %v1967, 0.0
    %v2184 = vmax.f32 %v1969, 0.0
    %v2185 = vmax.f32 %v1971, 0.0
    %v2186 = vmax.f32 %v1973, 0.0
    %v2187 = vmax.f32 %v1977, 0.0
    %v2188 = vmax.f32 %v1979, 0.0
    %v2189 = vmax.f32 %v1981, 0.0
    %v2190 = vmax.f32 %v1983, 0.0
    %v2191 = vmax.f32 %v1987, 0.0
    %v2192 = vmax.f32 %v1989, 0.0
    %v2193 = vmax.f32 %v1991, 0.0
    %v2194 = vmax.f32 %v1993, 0.0
    %v2195 = vmax.f32 %v1997, 0.0
    %v2196 = vmax.f32 %v1999, 0.0
    %v2197 = vmax.f32 %v2001, 0.0
    %v2198 = vmax.f32 %v2003, 0.0
    %v2199 = vmax.f32 %v2007, 0.0
    %v2200 = vmax.f32 %v2009, 0.0
    %v2201 = vmax.f32 %v2011, 0.0
    %v2202 = vmax.f32 %v2013, 0.0
    %v2203 = vmax.f32 %v2017, 0.0
    %v2204 = vmax.f32 %v2019, 0.0
    %v2205 = vmax.f32 %v2021, 0.0
    %v2206 = vmax.f32 %v2023, 0.0
    %v2207 = vmax.f32 %v2027, 0.0
    %v2208 = vmax.f32 %v2029, 0.0
    %v2209 = vmax.f32 %v2031, 0.0
    %v2210 = vmax.f32 %v2033, 0.0
    %v2211 = vmax.f32 %v2037, 0.0
    %v2212 = vmax.f32 %v2039, 0.0
    %v2213 = vmax.f32 %v2041, 0.0
    %v2214 = vmax.f32 %v2043, 0.0
    %v2215 = vmax.f32 %v2047, 0.0
    %v2216 = vmax.f32 %v2049, 0.0
    %v2217 = vmax.f32 %v2051, 0.0
    %v2218 = vmax.f32 %v2053, 0.0
    %v2219 = vmax.f32 %v2057, 0.0
    %v2220 = vmax.f32 %v2059, 0.0
    %v2221 = vmax.f32 %v2061, 0.0
    %v2222 = vmax.f32 %v2063, 0.0
    %v2223 = vmax.f32 %v2067, 0.0
    %v2224 = vmax.f32 %v2069, 0.0
    %v2225 = vmax.f32 %v2071, 0.0
    %v2226 = vmax.f32 %v2073, 0.0
    %v2227 = vmax.f32 %v2077, 0.0
    %v2228 = vmax.f32 %v2079, 0.0
    %v2229 = vmax.f32 %v2081, 0.0
    %v2230 = vmax.f32 %v2083, 0.0
    %v2231 = vmax.f32 %v2087, 0.0
    %v2232 = vmax.f32 %v2089, 0.0
    %v2233 = vmax.f32 %v2091, 0.0
    %v2234 = vmax.f32 %v2093, 0.0
    %v2235 = vmax.f32 %v2097, 0.0
    %v2236 = vmax.f32 %v2099, 0.0
    %v2237 = vmax.f32 %v2101, 0.0
    %v2238 = vmax.f32 %v2103, 0.0
    %v2239 = vmax.f32 %v2107, 0.0
    %v2240 = vmax.f32 %v2109, 0.0
    %v2241 = vmax.f32 %v2111, 0.0
    %v2242 = vmax.f32 %v2113, 0.0
    %v2243 = vpack.c.bf16 %v2117, %v2115
    %v2244 = vpack.c.bf16 %v2118, %v2116
    %v2245 = vpack.c.bf16 %v2121, %v2119
    %v2246 = vpack.c.bf16 %v2122, %v2120
    %v2247 = vpack.c.bf16 %v2125, %v2123
    %v2248 = vpack.c.bf16 %v2126, %v2124
    %v2249 = vpack.c.bf16 %v2129, %v2127
    %v2250 = vpack.c.bf16 %v2130, %v2128
    %v2251 = vpack.c.bf16 %v2133, %v2131
    %v2252 = vpack.c.bf16 %v2134, %v2132
    %v2253 = vpack.c.bf16 %v2137, %v2135
    %v2254 = vpack.c.bf16 %v2138, %v2136
    %v2255 = vpack.c.bf16 %v2141, %v2139
    %v2256 = vpack.c.bf16 %v2142, %v2140
    %v2257 = vpack.c.bf16 %v2145, %v2143
    %v2258 = vpack.c.bf16 %v2146, %v2144
    %v2259 = vpack.c.bf16 %v2149, %v2147
    %v2260 = vpack.c.bf16 %v2150, %v2148
    %v2261 = vpack.c.bf16 %v2153, %v2151
    %v2262 = vpack.c.bf16 %v2154, %v2152
    %v2263 = vpack.c.bf16 %v2157, %v2155
    %v2264 = vpack.c.bf16 %v2158, %v2156
    %v2265 = vpack.c.bf16 %v2161, %v2159
    %v2266 = vpack.c.bf16 %v2162, %v2160
    %v2267 = vpack.c.bf16 %v2165, %v2163
    %v2268 = vpack.c.bf16 %v2166, %v2164
    %v2269 = vpack.c.bf16 %v2169, %v2167
    %v2270 = vpack.c.bf16 %v2170, %v2168
    %v2271 = vpack.c.bf16 %v2173, %v2171
    %v2272 = vpack.c.bf16 %v2174, %v2172
    %v2273 = vpack.c.bf16 %v2177, %v2175
    %v2274 = vpack.c.bf16 %v2178, %v2176
    %v2275 = vpack.c.bf16 %v2181, %v2179
    %v2276 = vpack.c.bf16 %v2182, %v2180
    %v2277 = vpack.c.bf16 %v2185, %v2183
    %v2278 = vpack.c.bf16 %v2186, %v2184
    %v2279 = vpack.c.bf16 %v2189, %v2187
    %v2280 = vpack.c.bf16 %v2190, %v2188
    %v2281 = vpack.c.bf16 %v2193, %v2191
    %v2282 = vpack.c.bf16 %v2194, %v2192
    %v2283 = vpack.c.bf16 %v2197, %v2195
    %v2284 = vpack.c.bf16 %v2198, %v2196
    %v2285 = vpack.c.bf16 %v2201, %v2199
    %v2286 = vpack.c.bf16 %v2202, %v2200
    %v2287 = vpack.c.bf16 %v2205, %v2203
    %v2288 = vpack.c.bf16 %v2206, %v2204
    %v2289 = vpack.c.bf16 %v2209, %v2207
    %v2290 = vpack.c.bf16 %v2210, %v2208
    %v2291 = vpack.c.bf16 %v2213, %v2211
    %v2292 = vpack.c.bf16 %v2214, %v2212
    %v2293 = vpack.c.bf16 %v2217, %v2215
    %v2294 = vpack.c.bf16 %v2218, %v2216
    %v2295 = vpack.c.bf16 %v2221, %v2219
    %v2296 = vpack.c.bf16 %v2222, %v2220
    %v2297 = vpack.c.bf16 %v2225, %v2223
    %v2298 = vpack.c.bf16 %v2226, %v2224
    %v2299 = vpack.c.bf16 %v2229, %v2227
    %v2300 = vpack.c.bf16 %v2230, %v2228
    %v2301 = vpack.c.bf16 %v2233, %v2231
    %v2302 = vpack.c.bf16 %v2234, %v2232
    %v2303 = vpack.c.bf16 %v2237, %v2235
    %v2304 = vpack.c.bf16 %v2238, %v2236
    %v2305 = vpack.c.bf16 %v2241, %v2239
    %v2306 = vpack.c.bf16 %v2242, %v2240
    %v2307 = vld [vmem:[#allocation2] sm:$0xf]
    %v2308 = vld [vmem:[#allocation2 + $0x4] sm:$0xf]
    %v2309 = vld [vmem:[#allocation2 + $0x8] sm:$0xf]
    %v2310 = vld [vmem:[#allocation2 + $0xc] sm:$0xf]
    %v2311 = vld [vmem:[#allocation2 + $0x10] sm:$0xf]
    %v2312 = vld [vmem:[#allocation2 + $0x14] sm:$0xf]
    %v2313 = vld [vmem:[#allocation2 + $0x18] sm:$0xf]
    %v2314 = vld [vmem:[#allocation2 + $0x1c] sm:$0xf]
    %v2315 = vld [vmem:[#allocation2 + $0x20] sm:$0xf]
    %v2316 = vld [vmem:[#allocation2 + $0x24] sm:$0xf]
    %v2317 = vld [vmem:[#allocation2 + $0x28] sm:$0xf]
    %v2318 = vld [vmem:[#allocation2 + $0x2c] sm:$0xf]
    %v2319 = vld [vmem:[#allocation2 + $0x30] sm:$0xf]
    %v2320 = vld [vmem:[#allocation2 + $0x34] sm:$0xf]
    %v2321 = vld [vmem:[#allocation2 + $0x38] sm:$0xf]
    %v2322 = vld [vmem:[#allocation2 + $0x3c] sm:$0xf]
    %v2323 = vld [vmem:[#allocation2 + $0x40] sm:$0xf]
    %v2324 = vld [vmem:[#allocation2 + $0x44] sm:$0xf]
    %v2325 = vld [vmem:[#allocation2 + $0x48] sm:$0xf]
    %v2326 = vld [vmem:[#allocation2 + $0x4c] sm:$0xf]
    %v2327 = vld [vmem:[#allocation2 + $0x50] sm:$0xf]
    %v2328 = vld [vmem:[#allocation2 + $0x54] sm:$0xf]
    %v2329 = vld [vmem:[#allocation2 + $0x58] sm:$0xf]
    %v2330 = vld [vmem:[#allocation2 + $0x5c] sm:$0xf]
    %v2331 = vld [vmem:[#allocation2 + $0x60] sm:$0xf]
    %v2332 = vld [vmem:[#allocation2 + $0x64] sm:$0xf]
    %v2333 = vld [vmem:[#allocation2 + $0x68] sm:$0xf]
    %v2334 = vld [vmem:[#allocation2 + $0x6c] sm:$0xf]
    %v2335 = vld [vmem:[#allocation2 + $0x70] sm:$0xf]
    %v2336 = vld [vmem:[#allocation2 + $0x74] sm:$0xf]
    %v2337 = vld [vmem:[#allocation2 + $0x78] sm:$0xf]
    %v2338 = vld [vmem:[#allocation2 + $0x7c] sm:$0xf]
    %v2339 = vld [vmem:[%s8] sm:$0x1]
    %v2341 = vlaneseq
    %v2342 = vshrl.u32 %v2341, 7
    %v2343 = vsub.s32 0, %v2342
    %v2344 = vrot.slane %v2339, %v2343
    %v2378 = vunpack.c.l.b16 %v2307
    %v2379 = vunpack.c.l.b16 %v2308
    %v2380 = vunpack.c.l.b16 %v2309
    %v2381 = vunpack.c.l.b16 %v2310
    %v2382 = vunpack.c.l.b16 %v2311
    %v2383 = vunpack.c.l.b16 %v2312
    %v2384 = vunpack.c.l.b16 %v2313
    %v2385 = vunpack.c.l.b16 %v2314
    %v2386 = vunpack.c.l.b16 %v2315
    %v2387 = vunpack.c.l.b16 %v2316
    %v2388 = vunpack.c.l.b16 %v2317
    %v2389 = vunpack.c.l.b16 %v2318
    %v2390 = vunpack.c.l.b16 %v2319
    %v2391 = vunpack.c.l.b16 %v2320
    %v2392 = vunpack.c.l.b16 %v2321
    %v2393 = vunpack.c.l.b16 %v2322
    %v2394 = vunpack.c.l.b16 %v2323
    %v2395 = vunpack.c.l.b16 %v2324
    %v2396 = vunpack.c.l.b16 %v2325
    %v2397 = vunpack.c.l.b16 %v2326
    %v2398 = vunpack.c.l.b16 %v2327
    %v2399 = vunpack.c.l.b16 %v2328
    %v2400 = vunpack.c.l.b16 %v2329
    %v2401 = vunpack.c.l.b16 %v2330
    %v2402 = vunpack.c.l.b16 %v2331
    %v2403 = vunpack.c.l.b16 %v2332
    %v2404 = vunpack.c.l.b16 %v2333
    %v2405 = vunpack.c.l.b16 %v2334
    %v2406 = vunpack.c.l.b16 %v2335
    %v2407 = vunpack.c.l.b16 %v2336
    %v2408 = vunpack.c.l.b16 %v2337
    %v2409 = vunpack.c.l.b16 %v2338
    %v2410 = vpack.c.b16 %v2379, %v2378
    %v2411 = vpack.c.b16 %v2381, %v2380
    %v2412 = vpack.c.b16 %v2383, %v2382
    %v2413 = vpack.c.b16 %v2385, %v2384
    %v2414 = vpack.c.b16 %v2387, %v2386
    %v2415 = vpack.c.b16 %v2389, %v2388
    %v2416 = vpack.c.b16 %v2391, %v2390
    %v2417 = vpack.c.b16 %v2393, %v2392
    %v2418 = vpack.c.b16 %v2395, %v2394
    %v2419 = vpack.c.b16 %v2397, %v2396
    %v2420 = vpack.c.b16 %v2399, %v2398
    %v2421 = vpack.c.b16 %v2401, %v2400
    %v2422 = vpack.c.b16 %v2403, %v2402
    %v2423 = vpack.c.b16 %v2405, %v2404
    %v2424 = vpack.c.b16 %v2407, %v2406
    %v2425 = vpack.c.b16 %v2409, %v2408
    %2442 = vmatprep.subr.bf16.mxu0 0
    %2443 = vmatpush1.bf16.msra.mxu0 %v2410
    %2444 = vmatprep.subr.bf16.mxu0 0
    %2445 = vmatpush1.bf16.msra.mxu0 %v2411
    %2446 = vmatprep.subr.bf16.mxu0 0
    %2447 = vmatpush1.bf16.msra.mxu0 %v2412
    %2448 = vmatprep.subr.bf16.mxu0 0
    %2449 = vmatpush1.bf16.msra.mxu0 %v2413
    %2450 = vmatprep.subr.bf16.mxu0 0
    %2451 = vmatpush1.bf16.msra.mxu0 %v2414
    %2452 = vmatprep.subr.bf16.mxu0 0
    %2453 = vmatpush1.bf16.msra.mxu0 %v2415
    %2454 = vmatprep.subr.bf16.mxu0 0
    %2455 = vmatpush1.bf16.msra.mxu0 %v2416
    %2456 = vmatprep.subr.bf16.mxu0 0
    %2457 = vmatpush1.bf16.msra.mxu0 %v2417
    %2458 = vmatprep.subr.bf16.mxu0 0
    %2459 = vmatpush1.bf16.msra.mxu0 %v2418
    %2460 = vmatprep.subr.bf16.mxu0 0
    %2461 = vmatpush1.bf16.msra.mxu0 %v2419
    %2462 = vmatprep.subr.bf16.mxu0 0
    %2463 = vmatpush1.bf16.msra.mxu0 %v2420
    %2464 = vmatprep.subr.bf16.mxu0 0
    %2465 = vmatpush1.bf16.msra.mxu0 %v2421
    %2466 = vmatprep.subr.bf16.mxu0 0
    %2467 = vmatpush1.bf16.msra.mxu0 %v2422
    %2468 = vmatprep.subr.bf16.mxu0 0
    %2469 = vmatpush1.bf16.msra.mxu0 %v2423
    %2470 = vmatprep.subr.bf16.mxu0 0
    %2471 = vmatpush1.bf16.msra.mxu0 %v2424
    %2472 = vmatprep.subr.bf16.mxu0 0
    %2473 = vmatpush1.bf16.msra.mxu0 %v2425
    %2474 = vmatprep.mubr.bf16.mxu0 %v2244
    %2475 = vmatmul.mubr.bf16.gmra.mrb[0].mxu0 %v2243
    %v2476 = vpop.f32.mrb[0].mxu0
    %v2477 = vadd.f32 %v2344, %v2476
    %v2478 = vpop.f32.mrb[0].mxu0
    %v2479 = vpop.f32.mrb[0].mxu0
    %v2480 = vadd.f32 %v2344, %v2479
    %v2481 = vpop.f32.mrb[0].mxu0
    %2482 = vmatprep.mubr.bf16.mxu0 %v2246
    %2483 = vmatmul.mubr.bf16.gmra.mrb[0].mxu0 %v2245
    %v2484 = vpop.f32.mrb[0].mxu0
    %v2485 = vadd.f32 %v2344, %v2484
    %v2486 = vpop.f32.mrb[0].mxu0
    %v2487 = vpop.f32.mrb[0].mxu0
    %v2488 = vadd.f32 %v2344, %v2487
    %v2489 = vpop.f32.mrb[0].mxu0
    %2490 = vmatprep.mubr.bf16.mxu0 %v2248
    %2491 = vmatmul.mubr.bf16.gmra.mrb[0].mxu0 %v2247
    %v2492 = vpop.f32.mrb[0].mxu0
    %v2493 = vadd.f32 %v2344, %v2492
    %v2494 = vpop.f32.mrb[0].mxu0
    %v2495 = vpop.f32.mrb[0].mxu0
    %v2496 = vadd.f32 %v2344, %v2495
    %v2497 = vpop.f32.mrb[0].mxu0
    %2498 = vmatprep.mubr.bf16.mxu0 %v2250
    %2499 = vmatmul.mubr.bf16.gmra.mrb[0].mxu0 %v2249
    %v2500 = vpop.f32.mrb[0].mxu0
    %v2501 = vadd.f32 %v2344, %v2500
    %v2502 = vpop.f32.mrb[0].mxu0
    %v2503 = vpop.f32.mrb[0].mxu0
    %v2504 = vadd.f32 %v2344, %v2503
    %v2505 = vpop.f32.mrb[0].mxu0
    %2506 = vmatprep.mubr.bf16.mxu0 %v2252
    %2507 = vmatmul.mubr.bf16.gmra.mrb[0].mxu0 %v2251
    %v2508 = vpop.f32.mrb[0].mxu0
    %v2509 = vadd.f32 %v2344, %v2508
    %v2510 = vpop.f32.mrb[0].mxu0
    %v2511 = vpop.f32.mrb[0].mxu0
    %v2512 = vadd.f32 %v2344, %v2511
    %v2513 = vpop.f32.mrb[0].mxu0
    %2514 = vmatprep.mubr.bf16.mxu0 %v2254
    %2515 = vmatmul.mubr.bf16.gmra.mrb[0].mxu0 %v2253
    %v2516 = vpop.f32.mrb[0].mxu0
    %v2517 = vadd.f32 %v2344, %v2516
    %v2518 = vpop.f32.mrb[0].mxu0
    %v2519 = vpop.f32.mrb[0].mxu0
    %v2520 = vadd.f32 %v2344, %v2519
    %v2521 = vpop.f32.mrb[0].mxu0
    %2522 = vmatprep.mubr.bf16.mxu0 %v2256
    %2523 = vmatmul.mubr.bf16.gmra.mrb[0].mxu0 %v2255
    %v2524 = vpop.f32.mrb[0].mxu0
    %v2525 = vadd.f32 %v2344, %v2524
    %v2526 = vpop.f32.mrb[0].mxu0
    %v2527 = vpop.f32.mrb[0].mxu0
    %v2528 = vadd.f32 %v2344, %v2527
    %v2529 = vpop.f32.mrb[0].mxu0
    %2530 = vmatprep.mubr.bf16.mxu0 %v2258
    %2531 = vmatmul.mubr.bf16.gmra.mrb[0].mxu0 %v2257
    %v2532 = vpop.f32.mrb[0].mxu0
    %v2533 = vadd.f32 %v2344, %v2532
    %v2534 = vpop.f32.mrb[0].mxu0
    %v2535 = vpop.f32.mrb[0].mxu0
    %v2536 = vadd.f32 %v2344, %v2535
    %v2537 = vpop.f32.mrb[0].mxu0
    %2538 = vmatprep.mubr.bf16.mxu0 %v2260
    %2539 = vmatmul.mubr.bf16.gmra.mrb[0].mxu0 %v2259
    %v2540 = vpop.f32.mrb[0].mxu0
    %v2541 = vadd.f32 %v2344, %v2540
    %v2542 = vpop.f32.mrb[0].mxu0
    %v2543 = vpop.f32.mrb[0].mxu0
    %v2544 = vadd.f32 %v2344, %v2543
    %v2545 = vpop.f32.mrb[0].mxu0
    %2546 = vmatprep.mubr.bf16.mxu0 %v2262
    %2547 = vmatmul.mubr.bf16.gmra.mrb[0].mxu0 %v2261
    %v2548 = vpop.f32.mrb[0].mxu0
    %v2549 = vadd.f32 %v2344, %v2548
    %v2550 = vpop.f32.mrb[0].mxu0
    %v2551 = vpop.f32.mrb[0].mxu0
    %v2552 = vadd.f32 %v2344, %v2551
    %v2553 = vpop.f32.mrb[0].mxu0
    %2554 = vmatprep.mubr.bf16.mxu0 %v2264
    %2555 = vmatmul.mubr.bf16.gmra.mrb[0].mxu0 %v2263
    %v2556 = vpop.f32.mrb[0].mxu0
    %v2557 = vadd.f32 %v2344, %v2556
    %v2558 = vpop.f32.mrb[0].mxu0
    %v2559 = vpop.f32.mrb[0].mxu0
    %v2560 = vadd.f32 %v2344, %v2559
    %v2561 = vpop.f32.mrb[0].mxu0
    %2562 = vmatprep.mubr.bf16.mxu0 %v2266
    %2563 = vmatmul.mubr.bf16.gmra.mrb[0].mxu0 %v2265
    %v2564 = vpop.f32.mrb[0].mxu0
    %v2565 = vadd.f32 %v2344, %v2564
    %v2566 = vpop.f32.mrb[0].mxu0
    %v2567 = vpop.f32.mrb[0].mxu0
    %v2568 = vadd.f32 %v2344, %v2567
    %v2569 = vpop.f32.mrb[0].mxu0
    %2570 = vmatprep.mubr.bf16.mxu0 %v2268
    %2571 = vmatmul.mubr.bf16.gmra.mrb[0].mxu0 %v2267
    %v2572 = vpop.f32.mrb[0].mxu0
    %v2573 = vadd.f32 %v2344, %v2572
    %v2574 = vpop.f32.mrb[0].mxu0
    %v2575 = vpop.f32.mrb[0].mxu0
    %v2576 = vadd.f32 %v2344, %v2575
    %v2577 = vpop.f32.mrb[0].mxu0
    %2578 = vmatprep.mubr.bf16.mxu0 %v2270
    %2579 = vmatmul.mubr.bf16.gmra.mrb[0].mxu0 %v2269
    %v2580 = vpop.f32.mrb[0].mxu0
    %v2581 = vadd.f32 %v2344, %v2580
    %v2582 = vpop.f32.mrb[0].mxu0
    %v2583 = vpop.f32.mrb[0].mxu0
    %v2584 = vadd.f32 %v2344, %v2583
    %v2585 = vpop.f32.mrb[0].mxu0
    %2586 = vmatprep.mubr.bf16.mxu0 %v2272
    %2587 = vmatmul.mubr.bf16.gmra.mrb[0].mxu0 %v2271
    %v2588 = vpop.f32.mrb[0].mxu0
    %v2589 = vadd.f32 %v2344, %v2588
    %v2590 = vpop.f32.mrb[0].mxu0
    %v2591 = vpop.f32.mrb[0].mxu0
    %v2592 = vadd.f32 %v2344, %v2591
    %v2593 = vpop.f32.mrb[0].mxu0
    %2594 = vmatprep.mubr.bf16.mxu0 %v2274
    %2595 = vmatmul.mubr.bf16.gmra.mrb[0].mxu0 %v2273
    %v2596 = vpop.f32.mrb[0].mxu0
    %v2597 = vadd.f32 %v2344, %v2596
    %v2598 = vpop.f32.mrb[0].mxu0
    %v2599 = vpop.f32.mrb[0].mxu0
    %v2600 = vadd.f32 %v2344, %v2599
    %v2601 = vpop.f32.mrb[0].mxu0
    %2602 = vmatprep.mubr.bf16.mxu0 %v2276
    %2603 = vmatmul.mubr.bf16.gmra.mrb[0].mxu0 %v2275
    %v2604 = vpop.f32.mrb[0].mxu0
    %v2605 = vadd.f32 %v2344, %v2604
    %v2606 = vpop.f32.mrb[0].mxu0
    %v2607 = vpop.f32.mrb[0].mxu0
    %v2608 = vadd.f32 %v2344, %v2607
    %v2609 = vpop.f32.mrb[0].mxu0
    %2610 = vmatprep.mubr.bf16.mxu0 %v2278
    %2611 = vmatmul.mubr.bf16.gmra.mrb[0].mxu0 %v2277
    %v2612 = vpop.f32.mrb[0].mxu0
    %v2613 = vadd.f32 %v2344, %v2612
    %v2614 = vpop.f32.mrb[0].mxu0
    %v2615 = vpop.f32.mrb[0].mxu0
    %v2616 = vadd.f32 %v2344, %v2615
    %v2617 = vpop.f32.mrb[0].mxu0
    %2618 = vmatprep.mubr.bf16.mxu0 %v2280
    %2619 = vmatmul.mubr.bf16.gmra.mrb[0].mxu0 %v2279
    %v2620 = vpop.f32.mrb[0].mxu0
    %v2621 = vadd.f32 %v2344, %v2620
    %v2622 = vpop.f32.mrb[0].mxu0
    %v2623 = vpop.f32.mrb[0].mxu0
    %v2624 = vadd.f32 %v2344, %v2623
    %v2625 = vpop.f32.mrb[0].mxu0
    %2626 = vmatprep.mubr.bf16.mxu0 %v2282
    %2627 = vmatmul.mubr.bf16.gmra.mrb[0].mxu0 %v2281
    %v2628 = vpop.f32.mrb[0].mxu0
    %v2629 = vadd.f32 %v2344, %v2628
    %v2630 = vpop.f32.mrb[0].mxu0
    %v2631 = vpop.f32.mrb[0].mxu0
    %v2632 = vadd.f32 %v2344, %v2631
    %v2633 = vpop.f32.mrb[0].mxu0
    %2634 = vmatprep.mubr.bf16.mxu0 %v2284
    %2635 = vmatmul.mubr.bf16.gmra.mrb[0].mxu0 %v2283
    %v2636 = vpop.f32.mrb[0].mxu0
    %v2637 = vadd.f32 %v2344, %v2636
    %v2638 = vpop.f32.mrb[0].mxu0
    %v2639 = vpop.f32.mrb[0].mxu0
    %v2640 = vadd.f32 %v2344, %v2639
    %v2641 = vpop.f32.mrb[0].mxu0
    %2642 = vmatprep.mubr.bf16.mxu0 %v2286
    %2643 = vmatmul.mubr.bf16.gmra.mrb[0].mxu0 %v2285
    %v2644 = vpop.f32.mrb[0].mxu0
    %v2645 = vadd.f32 %v2344, %v2644
    %v2646 = vpop.f32.mrb[0].mxu0
    %v2647 = vpop.f32.mrb[0].mxu0
    %v2648 = vadd.f32 %v2344, %v2647
    %v2649 = vpop.f32.mrb[0].mxu0
    %2650 = vmatprep.mubr.bf16.mxu0 %v2288
    %2651 = vmatmul.mubr.bf16.gmra.mrb[0].mxu0 %v2287
    %v2652 = vpop.f32.mrb[0].mxu0
    %v2653 = vadd.f32 %v2344, %v2652
    %v2654 = vpop.f32.mrb[0].mxu0
    %v2655 = vpop.f32.mrb[0].mxu0
    %v2656 = vadd.f32 %v2344, %v2655
    %v2657 = vpop.f32.mrb[0].mxu0
    %2658 = vmatprep.mubr.bf16.mxu0 %v2290
    %2659 = vmatmul.mubr.bf16.gmra.mrb[0].mxu0 %v2289
    %v2660 = vpop.f32.mrb[0].mxu0
    %v2661 = vadd.f32 %v2344, %v2660
    %v2662 = vpop.f32.mrb[0].mxu0
    %v2663 = vpop.f32.mrb[0].mxu0
    %v2664 = vadd.f32 %v2344, %v2663
    %v2665 = vpop.f32.mrb[0].mxu0
    %2666 = vmatprep.mubr.bf16.mxu0 %v2292
    %2667 = vmatmul.mubr.bf16.gmra.mrb[0].mxu0 %v2291
    %v2668 = vpop.f32.mrb[0].mxu0
    %v2669 = vadd.f32 %v2344, %v2668
    %v2670 = vpop.f32.mrb[0].mxu0
    %v2671 = vpop.f32.mrb[0].mxu0
    %v2672 = vadd.f32 %v2344, %v2671
    %v2673 = vpop.f32.mrb[0].mxu0
    %2674 = vmatprep.mubr.bf16.mxu0 %v2294
    %2675 = vmatmul.mubr.bf16.gmra.mrb[0].mxu0 %v2293
    %v2676 = vpop.f32.mrb[0].mxu0
    %v2677 = vadd.f32 %v2344, %v2676
    %v2678 = vpop.f32.mrb[0].mxu0
    %v2679 = vpop.f32.mrb[0].mxu0
    %v2680 = vadd.f32 %v2344, %v2679
    %v2681 = vpop.f32.mrb[0].mxu0
    %2682 = vmatprep.mubr.bf16.mxu0 %v2296
    %2683 = vmatmul.mubr.bf16.gmra.mrb[0].mxu0 %v2295
    %v2684 = vpop.f32.mrb[0].mxu0
    %v2685 = vadd.f32 %v2344, %v2684
    %v2686 = vpop.f32.mrb[0].mxu0
    %v2687 = vpop.f32.mrb[0].mxu0
    %v2688 = vadd.f32 %v2344, %v2687
    %v2689 = vpop.f32.mrb[0].mxu0
    %2690 = vmatprep.mubr.bf16.mxu0 %v2298
    %2691 = vmatmul.mubr.bf16.gmra.mrb[0].mxu0 %v2297
    %v2692 = vpop.f32.mrb[0].mxu0
    %v2693 = vadd.f32 %v2344, %v2692
    %v2694 = vpop.f32.mrb[0].mxu0
    %v2695 = vpop.f32.mrb[0].mxu0
    %v2696 = vadd.f32 %v2344, %v2695
    %v2697 = vpop.f32.mrb[0].mxu0
    %2698 = vmatprep.mubr.bf16.mxu0 %v2300
    %2699 = vmatmul.mubr.bf16.gmra.mrb[0].mxu0 %v2299
    %v2700 = vpop.f32.mrb[0].mxu0
    %v2701 = vadd.f32 %v2344, %v2700
    %v2702 = vpop.f32.mrb[0].mxu0
    %v2703 = vpop.f32.mrb[0].mxu0
    %v2704 = vadd.f32 %v2344, %v2703
    %v2705 = vpop.f32.mrb[0].mxu0
    %2706 = vmatprep.mubr.bf16.mxu0 %v2302
    %2707 = vmatmul.mubr.bf16.gmra.mrb[0].mxu0 %v2301
    %v2708 = vpop.f32.mrb[0].mxu0
    %v2709 = vadd.f32 %v2344, %v2708
    %v2710 = vpop.f32.mrb[0].mxu0
    %v2711 = vpop.f32.mrb[0].mxu0
    %v2712 = vadd.f32 %v2344, %v2711
    %v2713 = vpop.f32.mrb[0].mxu0
    %2714 = vmatprep.mubr.bf16.mxu0 %v2304
    %2715 = vmatmul.mubr.bf16.gmra.mrb[0].mxu0 %v2303
    %v2716 = vpop.f32.mrb[0].mxu0
    %v2717 = vadd.f32 %v2344, %v2716
    %v2718 = vpop.f32.mrb[0].mxu0
    %v2719 = vpop.f32.mrb[0].mxu0
    %v2720 = vadd.f32 %v2344, %v2719
    %v2721 = vpop.f32.mrb[0].mxu0
    %2722 = vmatprep.mubr.bf16.mxu0 %v2306
    %2723 = vmatmul.mubr.bf16.gmra.mrb[0].mxu0 %v2305
    %v2724 = vpop.f32.mrb[0].mxu0
    %v2725 = vadd.f32 %v2344, %v2724
    %v2726 = vpop.f32.mrb[0].mxu0
    %v2727 = vpop.f32.mrb[0].mxu0
    %v2728 = vadd.f32 %v2344, %v2727
    %v2729 = vpop.f32.mrb[0].mxu0
    %2730 = vdwg.mxu0
    %2731 = vxpose.xlu0.b32.start [1/16] %v2477, 128
    %2732 = vxpose.xlu0.b32.cont [2/16] %v2480, 128
    %2733 = vxpose.xlu0.b32.cont [3/16] %v2485, 128
    %2734 = vxpose.xlu0.b32.cont [4/16] %v2488, 128
    %2735 = vxpose.xlu0.b32.cont [5/16] %v2493, 128
    %2736 = vxpose.xlu0.b32.cont [6/16] %v2496, 128
    %2737 = vxpose.xlu0.b32.cont [7/16] %v2501, 128
    %2738 = vxpose.xlu0.b32.cont [8/16] %v2504, 128
    %2739 = vxpose.xlu0.b32.cont [9/16] %v2509, 128
    %2740 = vxpose.xlu0.b32.cont [10/16] %v2512, 128
    %2741 = vxpose.xlu0.b32.cont [11/16] %v2517, 128
    %2742 = vxpose.xlu0.b32.cont [12/16] %v2520, 128
    %2743 = vxpose.xlu0.b32.cont [13/16] %v2525, 128
    %2744 = vxpose.xlu0.b32.cont [14/16] %v2528, 128
    %2745 = vxpose.xlu0.b32.cont [15/16] %v2533, 128
    %2746 = vxpose.xlu0.b32.end [16/16] %v2536, 128
    %v2747 = vpop.trf.xlu0
    %v2748 = vpop.trf.xlu0
    %v2749 = vpop.trf.xlu0
    %v2750 = vpop.trf.xlu0
    %v2751 = vpop.trf.xlu0
    %v2752 = vpop.trf.xlu0
    %v2753 = vpop.trf.xlu0
    %v2754 = vpop.trf.xlu0
    %v2755 = vpop.trf.xlu0
    %v2756 = vpop.trf.xlu0
    %v2757 = vpop.trf.xlu0
    %v2758 = vpop.trf.xlu0
    %v2759 = vpop.trf.xlu0
    %v2760 = vpop.trf.xlu0
    %v2761 = vpop.trf.xlu0
    %v2762 = vpop.trf.xlu0
    %2763 = vxpose.xlu0.b32.start [1/16] %v2541, 128
    %2764 = vxpose.xlu0.b32.cont [2/16] %v2544, 128
    %2765 = vxpose.xlu0.b32.cont [3/16] %v2549, 128
    %2766 = vxpose.xlu0.b32.cont [4/16] %v2552, 128
    %2767 = vxpose.xlu0.b32.cont [5/16] %v2557, 128
    %2768 = vxpose.xlu0.b32.cont [6/16] %v2560, 128
    %2769 = vxpose.xlu0.b32.cont [7/16] %v2565, 128
    %2770 = vxpose.xlu0.b32.cont [8/16] %v2568, 128
    %2771 = vxpose.xlu0.b32.cont [9/16] %v2573, 128
    %2772 = vxpose.xlu0.b32.cont [10/16] %v2576, 128
    %2773 = vxpose.xlu0.b32.cont [11/16] %v2581, 128
    %2774 = vxpose.xlu0.b32.cont [12/16] %v2584, 128
    %2775 = vxpose.xlu0.b32.cont [13/16] %v2589, 128
    %2776 = vxpose.xlu0.b32.cont [14/16] %v2592, 128
    %2777 = vxpose.xlu0.b32.cont [15/16] %v2597, 128
    %2778 = vxpose.xlu0.b32.end [16/16] %v2600, 128
    %v2779 = vpop.trf.xlu0
    %v2780 = vpop.trf.xlu0
    %v2781 = vpop.trf.xlu0
    %v2782 = vpop.trf.xlu0
    %v2783 = vpop.trf.xlu0
    %v2784 = vpop.trf.xlu0
    %v2785 = vpop.trf.xlu0
    %v2786 = vpop.trf.xlu0
    %v2787 = vpop.trf.xlu0
    %v2788 = vpop.trf.xlu0
    %v2789 = vpop.trf.xlu0
    %v2790 = vpop.trf.xlu0
    %v2791 = vpop.trf.xlu0
    %v2792 = vpop.trf.xlu0
    %v2793 = vpop.trf.xlu0
    %v2794 = vpop.trf.xlu0
    %2795 = vxpose.xlu0.b32.start [1/16] %v2605, 128
    %2796 = vxpose.xlu0.b32.cont [2/16] %v2608, 128
    %2797 = vxpose.xlu0.b32.cont [3/16] %v2613, 128
    %2798 = vxpose.xlu0.b32.cont [4/16] %v2616, 128
    %2799 = vxpose.xlu0.b32.cont [5/16] %v2621, 128
    %2800 = vxpose.xlu0.b32.cont [6/16] %v2624, 128
    %2801 = vxpose.xlu0.b32.cont [7/16] %v2629, 128
    %2802 = vxpose.xlu0.b32.cont [8/16] %v2632, 128
    %2803 = vxpose.xlu0.b32.cont [9/16] %v2637, 128
    %2804 = vxpose.xlu0.b32.cont [10/16] %v2640, 128
    %2805 = vxpose.xlu0.b32.cont [11/16] %v2645, 128
    %2806 = vxpose.xlu0.b32.cont [12/16] %v2648, 128
    %2807 = vxpose.xlu0.b32.cont [13/16] %v2653, 128
    %2808 = vxpose.xlu0.b32.cont [14/16] %v2656, 128
    %2809 = vxpose.xlu0.b32.cont [15/16] %v2661, 128
    %2810 = vxpose.xlu0.b32.end [16/16] %v2664, 128
    %v2811 = vpop.trf.xlu0
    %v2812 = vpop.trf.xlu0
    %v2813 = vpop.trf.xlu0
    %v2814 = vpop.trf.xlu0
    %v2815 = vpop.trf.xlu0
    %v2816 = vpop.trf.xlu0
    %v2817 = vpop.trf.xlu0
    %v2818 = vpop.trf.xlu0
    %v2819 = vpop.trf.xlu0
    %v2820 = vpop.trf.xlu0
    %v2821 = vpop.trf.xlu0
    %v2822 = vpop.trf.xlu0
    %v2823 = vpop.trf.xlu0
    %v2824 = vpop.trf.xlu0
    %v2825 = vpop.trf.xlu0
    %v2826 = vpop.trf.xlu0
    %2827 = vxpose.xlu0.b32.start [1/16] %v2669, 128
    %2828 = vxpose.xlu0.b32.cont [2/16] %v2672, 128
    %2829 = vxpose.xlu0.b32.cont [3/16] %v2677, 128
    %2830 = vxpose.xlu0.b32.cont [4/16] %v2680, 128
    %2831 = vxpose.xlu0.b32.cont [5/16] %v2685, 128
    %2832 = vxpose.xlu0.b32.cont [6/16] %v2688, 128
    %2833 = vxpose.xlu0.b32.cont [7/16] %v2693, 128
    %2834 = vxpose.xlu0.b32.cont [8/16] %v2696, 128
    %2835 = vxpose.xlu0.b32.cont [9/16] %v2701, 128
    %2836 = vxpose.xlu0.b32.cont [10/16] %v2704, 128
    %2837 = vxpose.xlu0.b32.cont [11/16] %v2709, 128
    %2838 = vxpose.xlu0.b32.cont [12/16] %v2712, 128
    %2839 = vxpose.xlu0.b32.cont [13/16] %v2717, 128
    %2840 = vxpose.xlu0.b32.cont [14/16] %v2720, 128
    %2841 = vxpose.xlu0.b32.cont [15/16] %v2725, 128
    %2842 = vxpose.xlu0.b32.end [16/16] %v2728, 128
    %v2843 = vpop.trf.xlu0
    %v2844 = vpop.trf.xlu0
    %v2845 = vpop.trf.xlu0
    %v2846 = vpop.trf.xlu0
    %v2847 = vpop.trf.xlu0
    %v2848 = vpop.trf.xlu0
    %v2849 = vpop.trf.xlu0
    %v2850 = vpop.trf.xlu0
    %v2851 = vpop.trf.xlu0
    %v2852 = vpop.trf.xlu0
    %v2853 = vpop.trf.xlu0
    %v2854 = vpop.trf.xlu0
    %v2855 = vpop.trf.xlu0
    %v2856 = vpop.trf.xlu0
    %v2857 = vpop.trf.xlu0
    %v2858 = vpop.trf.xlu0
    %v2863 = vcombine.low %v2747, %v2779
    %v2864 = vcombine.low %v2811, %v2843
    %v2866 = vunpack.c.l.s4 1966171168
    %v2867 = vunpack.c.0.s8 %v2866
    %v2868 = vlaneseq
    %v2869 = vshrl.u32 %v2868, 7
    %v2870 = vsub.s32 %v2867, %v2869
    %v2871 = vrot.slane %v2863, %v2870
    %v2873 = vunpack.c.l.s4 1966171168
    %v2874 = vunpack.c.0.s8 %v2873
    %v2875 = vlaneseq
    %v2876 = vshrl.u32 %v2875, 7
    %v2877 = vsub.s32 %v2874, %v2876
    %v2878 = vrot.slane %v2864, %v2877
    %v2879 = vcombine.low %v2871, %v2878
    %v2881 = vunpack.c.l.s4 1966171168
    %v2882 = vunpack.c.0.s8 %v2881
    %v2883 = vlaneseq
    %v2884 = vshrl.u32 %v2883, 7
    %v2885 = vsub.s32 %v2882, %v2884
    %v2886 = vrot.slane %v2879, %v2885
    %v2888 = vlaneseq
    %vm2889 = vcmp.ge.s32.totalorder %v2888, 0
    %vm2890 = vcmp.lt.s32.totalorder %v2888, 512
    %vm2891 = vmand %vm2889, %vm2890
    %2892 = vst.msk [vmem:[%s9] sm:$0xf] %vm2891, %v2886
    // Predicated region
    $region42: #{mlp_forward.1} parent=1 // pred_check
      _
    $region43: #{mlp_forward.1} parent=1 // pred_check_branch
      %2894 = sbr.rel (0) target = $region45
    $region44: #{mlp_forward.1} parent=1 // pred_region
      _
    $region45: #{mlp_forward.1} parent=1 // pred_fallthru
      _
    // Predicated region
    $region46: #{mlp_forward.1} parent=1 // pred_check
      _
    $region47: #{mlp_forward.1} parent=1 // pred_check_branch
      %2896 = sbr.rel (0) target = $region49
    $region48: #{mlp_forward.1} parent=1 // pred_region
      _
    $region49: #{mlp_forward.1} parent=1 // pred_fallthru
      _
    %2897 = vsyncpa [#allocation3], 1

</llo_original>
